<compile_context>
chip_gen: v7x
topology: tpu7x:2x2x1
jax: 0.10.0
libtpu: 0.0.40
codegen_flags: <defaults>
</compile_context>

<pallas_src>
import jax
import jax.numpy as jnp
from jax import lax
from jax.experimental import pallas as pl
from jax.experimental.pallas import tpu as pltpu


def _lstm_survival_kernel(x_ref, wih_ref, bias_ref, whh_ref, aff_ref,
                          fcw_ref, fcb_ref, out_ref, xw_ref):
    # x_ref   : (T*B, 1)  time-major input column (x_tm[t*B+b] = x[b, t])
    # wih_ref : (1, 4H)   input weights (0.5 pre-scale baked into i/f/o cols)
    # bias_ref: (1, 4H)   b_ih + b_hh   (0.5 pre-scale baked into i/f/o cols)
    # whh_ref : (H, 4H)   fused recurrent weights, pre-transposed (h @ W),
    #                     0.5 pre-scale baked into i/f/o columns
    # aff_ref : (2, 4H)   activation fixup: row0 = scale, row1 = offset so that
    #                     act = tanh(pre)*scale + offset gives sigmoid for
    #                     i/f/o columns and tanh for g columns
    # fcw_ref : (1, H)    final linear weight row
    # fcb_ref : (1,) SMEM final linear bias scalar
    # out_ref : (B, 1)    risk scores
    # xw_ref  : (T*B, 4H) VMEM scratch for the precomputed input projection
    TB = x_ref.shape[0]
    B = out_ref.shape[0]
    H4 = whh_ref.shape[1]
    H = H4 // 4
    T = TB // B

    # --- prologue: input projection for ALL timesteps at once (one broadcast
    #     mul + add, off the serial recurrent chain).
    xw_ref[...] = x_ref[...] * wih_ref[...] + bias_ref[...]        # (T*B, 4H)

    # --- hoisted loop invariants (nothing re-broadcast per step).
    whh = whh_ref[...]                                             # (H, 4H)
    a_scale = aff_ref[0:1, :]                                      # (1, 4H)
    a_off = aff_ref[1:2, :]                                        # (1, 4H)

    def gates(pre):
        # one full-width EUP tanh; per-gate affine fixup on the VPU
        t = jnp.tanh(pre)
        return t * a_scale + a_off                                 # (B, 4H)

    # --- peeled step 0: h0 = c0 = 0 -> no matmul, c1 = i*g.
    a0 = gates(xw_ref[0:B, :])
    c = a0[:, 0:H] * a0[:, 2 * H:3 * H]                            # i * g
    h = a0[:, 3 * H:4 * H] * jnp.tanh(c)                           # o * tanh(c)

    def step(t, carry):
        h, c = carry
        row = pl.multiple_of(t * B, B)
        xw_t = xw_ref[pl.ds(row, B), :]                            # (B, 4H)
        pre = xw_t + jnp.dot(h, whh, preferred_element_type=jnp.float32)
        a = gates(pre)
        c_new = a[:, H:2 * H] * c + a[:, 0:H] * a[:, 2 * H:3 * H]  # f*c + i*g
        h_new = a[:, 3 * H:4 * H] * jnp.tanh(c_new)                # o*tanh(c)
        return (h_new, c_new)

    # T is static and short: fully unroll so the LLO scheduler sees across steps.
    h_last, _ = lax.fori_loop(1, T, step, (h, c), unroll=True)

    # fc head as VPU mul + row-reduce (no MXU push for a 1-lane result).
    out_ref[...] = (jnp.sum(h_last * fcw_ref[...], axis=-1, keepdims=True)
                    + fcb_ref[0])


def lstm_survival_pallas(x, w_ih, w_hh, b_ih, b_hh, fc_w, fc_b):
    """x: (B, T) float32. Returns risk: (B,) float32."""
    B, T = x.shape
    H4 = w_ih.shape[0]
    H = H4 // 4

    # ---- one-time parameter prep (plain JAX glue on tiny arrays) ----
    # sigmoid(z) = 0.5*(1 + tanh(z/2)): fold the /2 into the i/f/o columns of
    # every pre-activation contributor; g (tanh gate) columns stay unscaled.
    half = jnp.full((H,), 0.5, jnp.float32)
    one = jnp.full((H,), 1.0, jnp.float32)
    zero = jnp.zeros((H,), jnp.float32)
    gate_scale = jnp.concatenate([half, half, one, half])          # i,f,g,o
    act_scale = jnp.concatenate([half, half, one, half])           # post-tanh
    act_off = jnp.concatenate([half, half, zero, half])
    act_aff = jnp.stack([act_scale, act_off])                      # (2, 4H)

    wih_row = (w_ih.astype(jnp.float32)[:, 0] * gate_scale).reshape(1, H4)
    bias_row = ((b_ih + b_hh).astype(jnp.float32) * gate_scale).reshape(1, H4)
    # Fused recurrent weight, transposed so the kernel does h @ W: (H, 4H).
    whh_fused = w_hh.astype(jnp.float32).T * gate_scale[None, :]
    fcw_row = fc_w.astype(jnp.float32).reshape(1, H)
    fcb = fc_b.astype(jnp.float32).reshape(1,)

    # Time-major input column: x_tm[t*B + b, 0] = x[b, t].
    x_tm = x.astype(jnp.float32).T.reshape(T * B, 1)

    out = pl.pallas_call(
        _lstm_survival_kernel,
        out_shape=jax.ShapeDtypeStruct((B, 1), jnp.float32),
        grid=(1,),
        in_specs=[
            pl.BlockSpec((T * B, 1), lambda i: (0, 0)),
            pl.BlockSpec((1, H4), lambda i: (0, 0)),
            pl.BlockSpec((1, H4), lambda i: (0, 0)),
            pl.BlockSpec((H, H4), lambda i: (0, 0)),
            pl.BlockSpec((2, H4), lambda i: (0, 0)),
            pl.BlockSpec((1, H), lambda i: (0, 0)),
            pl.BlockSpec(memory_space=pltpu.MemorySpace.SMEM),
        ],
        out_specs=pl.BlockSpec((B, 1), lambda i: (0, 0)),
        scratch_shapes=[pltpu.VMEM((T * B, H4), jnp.float32)],
        compiler_params=pltpu.CompilerParams(
            dimension_semantics=("arbitrary",)),
    )(x_tm, wih_row, bias_row, whh_fused, act_aff, fcw_row, fcb)
    return out[:, 0]


def lstm_survival_ref(x, w_ih, w_hh, b_ih, b_hh, fc_w, fc_b):
    """Pure-JAX reference mirroring torch.nn.LSTM + Linear (gate order i,f,g,o)."""
    B, T = x.shape
    H = w_hh.shape[1]
    xs = x.astype(jnp.float32)

    def step(carry, x_t):
        h, c = carry
        gates = (x_t[:, None] @ w_ih.T) + (h @ w_hh.T) + b_ih + b_hh
        i = jax.nn.sigmoid(gates[:, 0 * H:1 * H])
        f = jax.nn.sigmoid(gates[:, 1 * H:2 * H])
        g = jnp.tanh(gates[:, 2 * H:3 * H])
        o = jax.nn.sigmoid(gates[:, 3 * H:4 * H])
        c = f * c + i * g
        h = o * jnp.tanh(c)
        return (h, c), None

    (h, _), _ = lax.scan(step, (jnp.zeros((B, H)), jnp.zeros((B, H))),
                         jnp.transpose(xs, (1, 0)))
    risk = h @ fc_w.T + fc_b
    return risk[:, 0]


if __name__ == "__main__":
    B, T, H = 8, 16, 64  # batch, sequence length, hidden_size

    key = jax.random.PRNGKey(0)
    kx, k1, k2, k3, k4, k5, k6 = jax.random.split(key, 7)

    scale = 1.0 / jnp.sqrt(jnp.float32(H))  # PyTorch default uniform range
    x = jax.random.normal(kx, (B, T), jnp.float32)
    w_ih = jax.random.uniform(k1, (4 * H, 1), jnp.float32, -scale, scale)
    w_hh = jax.random.uniform(k2, (4 * H, H), jnp.float32, -scale, scale)
    b_ih = jax.random.uniform(k3, (4 * H,), jnp.float32, -scale, scale)
    b_hh = jax.random.uniform(k4, (4 * H,), jnp.float32, -scale, scale)
    fc_w = jax.random.uniform(k5, (1, H), jnp.float32, -scale, scale)
    fc_b = jax.random.uniform(k6, (1,), jnp.float32, -scale, scale)

    risk = jax.block_until_ready(
        lstm_survival_pallas(x, w_ih, w_hh, b_ih, b_hh, fc_w, fc_b))

    ref = jax.block_until_ready(
        lstm_survival_ref(x, w_ih, w_hh, b_ih, b_hh, fc_w, fc_b))

    assert risk.shape == (B,)
    assert jnp.allclose(risk, ref, atol=1e-4, rtol=1e-4), (risk, ref)
    print("KERNEL_OK")
</pallas_src>

<mosaic_0001>
module attributes {stable_mosaic.version = 11 : i64} {
  func.func @_lstm_survival_kernel(%arg0: i32, %arg1: memref<128x1xf32, #tpu.memory_space<vmem>>, %arg2: memref<1x256xf32, #tpu.memory_space<vmem>>, %arg3: memref<1x256xf32, #tpu.memory_space<vmem>>, %arg4: memref<64x256xf32, #tpu.memory_space<vmem>>, %arg5: memref<2x256xf32, #tpu.memory_space<vmem>>, %arg6: memref<1x64xf32, #tpu.memory_space<vmem>>, %arg7: memref<1xf32, #tpu.memory_space<smem>>, %arg8: memref<8x1xf32, #tpu.memory_space<vmem>>, %arg9: memref<128x256xf32, #tpu.memory_space<vmem>>) attributes {dimension_semantics = [#tpu.dimension_semantics<arbitrary>], iteration_bounds = array<i64: 1>, scalar_prefetch = 0 : i64, scratch_operands = 1 : i64, tpu.core_type = #tpu.core_type<tc>, window_params = [{pipeline_mode = #tpu.pipeline_mode<synchronous>, transform_indices = @transform_0, window_bounds = array<i64: 128, 1>}, {pipeline_mode = #tpu.pipeline_mode<synchronous>, transform_indices = @transform_1, window_bounds = array<i64: 1, 256>}, {pipeline_mode = #tpu.pipeline_mode<synchronous>, transform_indices = @transform_2, window_bounds = array<i64: 1, 256>}, {pipeline_mode = #tpu.pipeline_mode<synchronous>, transform_indices = @transform_3, window_bounds = array<i64: 64, 256>}, {pipeline_mode = #tpu.pipeline_mode<synchronous>, transform_indices = @transform_4, window_bounds = array<i64: 2, 256>}, {pipeline_mode = #tpu.pipeline_mode<synchronous>, transform_indices = @transform_5, window_bounds = array<i64: 1, 64>}, {transform_indices = @transform_6, window_bounds = array<i64: 1>}, {pipeline_mode = #tpu.pipeline_mode<synchronous>, transform_indices = @transform_7, window_bounds = array<i64: 8, 1>}]} {
    %c0 = arith.constant 0 : index
    %c0_0 = arith.constant 0 : index
    %0 = vector.load %arg1[%c0, %c0_0] : memref<128x1xf32, #tpu.memory_space<vmem>>, vector<128x1xf32>
    %c0_1 = arith.constant 0 : index
    %c0_2 = arith.constant 0 : index
    %1 = vector.load %arg2[%c0_1, %c0_2] : memref<1x256xf32, #tpu.memory_space<vmem>>, vector<1x256xf32>
    %2 = vector.broadcast %0 : vector<128x1xf32> to vector<128x256xf32>
    %3 = vector.broadcast %1 : vector<1x256xf32> to vector<128x256xf32>
    %4 = arith.mulf %2, %3 : vector<128x256xf32>
    %c0_3 = arith.constant 0 : index
    %c0_4 = arith.constant 0 : index
    %5 = vector.load %arg3[%c0_3, %c0_4] : memref<1x256xf32, #tpu.memory_space<vmem>>, vector<1x256xf32>
    %6 = vector.broadcast %5 : vector<1x256xf32> to vector<128x256xf32>
    %7 = arith.addf %4, %6 : vector<128x256xf32>
    %c0_5 = arith.constant 0 : index
    %c0_6 = arith.constant 0 : index
    %8 = vector.load %arg9[%c0_5, %c0_6] : memref<128x256xf32, #tpu.memory_space<vmem>>, vector<128x256xf32>
    tpu.vector_store %arg9[%c0_5, %c0_6], %7 {strides = array<i32>} : memref<128x256xf32, #tpu.memory_space<vmem>>, vector<128x256xf32>,
    %c0_7 = arith.constant 0 : index
    %c0_8 = arith.constant 0 : index
    %9 = vector.load %arg4[%c0_7, %c0_8] : memref<64x256xf32, #tpu.memory_space<vmem>>, vector<64x256xf32>
    %c0_9 = arith.constant 0 : index
    %c0_10 = arith.constant 0 : index
    %10 = vector.load %arg5[%c0_9, %c0_10] : memref<2x256xf32, #tpu.memory_space<vmem>>, vector<1x256xf32>
    %c1 = arith.constant 1 : index
    %c0_11 = arith.constant 0 : index
    %11 = vector.load %arg5[%c1, %c0_11] : memref<2x256xf32, #tpu.memory_space<vmem>>, vector<1x256xf32>
    %c0_12 = arith.constant 0 : index
    %c0_13 = arith.constant 0 : index
    %12 = vector.load %arg9[%c0_12, %c0_13] : memref<128x256xf32, #tpu.memory_space<vmem>>, vector<8x256xf32>
    %13 = math.tanh %12 : vector<8x256xf32>
    %14 = vector.broadcast %10 : vector<1x256xf32> to vector<8x256xf32>
    %15 = arith.mulf %13, %14 : vector<8x256xf32>
    %16 = vector.broadcast %11 : vector<1x256xf32> to vector<8x256xf32>
    %17 = arith.addf %15, %16 : vector<8x256xf32>
    %18 = vector.extract_strided_slice %17 {offsets = [0, 0], sizes = [8, 64], strides = [1, 1]} : vector<8x256xf32> to vector<8x64xf32>
    %19 = vector.extract_strided_slice %17 {offsets = [0, 128], sizes = [8, 64], strides = [1, 1]} : vector<8x256xf32> to vector<8x64xf32>
    %20 = arith.mulf %18, %19 : vector<8x64xf32>
    %21 = vector.extract_strided_slice %17 {offsets = [0, 192], sizes = [8, 64], strides = [1, 1]} : vector<8x256xf32> to vector<8x64xf32>
    %22 = math.tanh %20 : vector<8x64xf32>
    %23 = arith.mulf %21, %22 : vector<8x64xf32>
    %c1_i32 = arith.constant 1 : i32
    %c8_i32 = arith.constant 8 : i32
    %24 = arith.muli %c1_i32, %c8_i32 : i32
    %25 = tpu.assume_multiple %24, 8 : i32
    %26 = arith.index_cast %25 : i32 to index
    %c0_14 = arith.constant 0 : index
    %27 = vector.load %arg9[%26, %c0_14] : memref<128x256xf32, #tpu.memory_space<vmem>>, vector<8x256xf32>
    %cst = arith.constant dense<0.000000e+00> : vector<8x256xf32>
    %28 = tpu.matmul %23, %9, %cst {dimension_numbers = #tpu.dot_dimension_numbers<[1], [0], [0], [1], [0, 0, 1, 1], [], []>} : vector<8x64xf32>, vector<64x256xf32>, vector<8x256xf32> -> vector<8x256xf32>
    %29 = arith.addf %27, %28 : vector<8x256xf32>
    %30 = math.tanh %29 : vector<8x256xf32>
    %31 = vector.broadcast %10 : vector<1x256xf32> to vector<8x256xf32>
    %32 = arith.mulf %30, %31 : vector<8x256xf32>
    %33 = vector.broadcast %11 : vector<1x256xf32> to vector<8x256xf32>
    %34 = arith.addf %32, %33 : vector<8x256xf32>
    %35 = vector.extract_strided_slice %34 {offsets = [0, 64], sizes = [8, 64], strides = [1, 1]} : vector<8x256xf32> to vector<8x64xf32>
    %36 = arith.mulf %35, %20 : vector<8x64xf32>
    %37 = vector.extract_strided_slice %34 {offsets = [0, 0], sizes = [8, 64], strides = [1, 1]} : vector<8x256xf32> to vector<8x64xf32>
    %38 = vector.extract_strided_slice %34 {offsets = [0, 128], sizes = [8, 64], strides = [1, 1]} : vector<8x256xf32> to vector<8x64xf32>
    %39 = arith.mulf %37, %38 : vector<8x64xf32>
    %40 = arith.addf %36, %39 : vector<8x64xf32>
    %41 = vector.extract_strided_slice %34 {offsets = [0, 192], sizes = [8, 64], strides = [1, 1]} : vector<8x256xf32> to vector<8x64xf32>
    %42 = math.tanh %40 : vector<8x64xf32>
    %43 = arith.mulf %41, %42 : vector<8x64xf32>
    %c2_i32 = arith.constant 2 : i32
    %c8_i32_15 = arith.constant 8 : i32
    %44 = arith.muli %c2_i32, %c8_i32_15 : i32
    %45 = tpu.assume_multiple %44, 8 : i32
    %46 = arith.index_cast %45 : i32 to index
    %c0_16 = arith.constant 0 : index
    %47 = vector.load %arg9[%46, %c0_16] : memref<128x256xf32, #tpu.memory_space<vmem>>, vector<8x256xf32>
    %cst_17 = arith.constant dense<0.000000e+00> : vector<8x256xf32>
    %48 = tpu.matmul %43, %9, %cst_17 {dimension_numbers = #tpu.dot_dimension_numbers<[1], [0], [0], [1], [0, 0, 1, 1], [], []>} : vector<8x64xf32>, vector<64x256xf32>, vector<8x256xf32> -> vector<8x256xf32>
    %49 = arith.addf %47, %48 : vector<8x256xf32>
    %50 = math.tanh %49 : vector<8x256xf32>
    %51 = vector.broadcast %10 : vector<1x256xf32> to vector<8x256xf32>
    %52 = arith.mulf %50, %51 : vector<8x256xf32>
    %53 = vector.broadcast %11 : vector<1x256xf32> to vector<8x256xf32>
    %54 = arith.addf %52, %53 : vector<8x256xf32>
    %55 = vector.extract_strided_slice %54 {offsets = [0, 64], sizes = [8, 64], strides = [1, 1]} : vector<8x256xf32> to vector<8x64xf32>
    %56 = arith.mulf %55, %40 : vector<8x64xf32>
    %57 = vector.extract_strided_slice %54 {offsets = [0, 0], sizes = [8, 64], strides = [1, 1]} : vector<8x256xf32> to vector<8x64xf32>
    %58 = vector.extract_strided_slice %54 {offsets = [0, 128], sizes = [8, 64], strides = [1, 1]} : vector<8x256xf32> to vector<8x64xf32>
    %59 = arith.mulf %57, %58 : vector<8x64xf32>
    %60 = arith.addf %56, %59 : vector<8x64xf32>
    %61 = vector.extract_strided_slice %54 {offsets = [0, 192], sizes = [8, 64], strides = [1, 1]} : vector<8x256xf32> to vector<8x64xf32>
    %62 = math.tanh %60 : vector<8x64xf32>
    %63 = arith.mulf %61, %62 : vector<8x64xf32>
    %c3_i32 = arith.constant 3 : i32
    %c8_i32_18 = arith.constant 8 : i32
    %64 = arith.muli %c3_i32, %c8_i32_18 : i32
    %65 = tpu.assume_multiple %64, 8 : i32
    %66 = arith.index_cast %65 : i32 to index
    %c0_19 = arith.constant 0 : index
    %67 = vector.load %arg9[%66, %c0_19] : memref<128x256xf32, #tpu.memory_space<vmem>>, vector<8x256xf32>
    %cst_20 = arith.constant dense<0.000000e+00> : vector<8x256xf32>
    %68 = tpu.matmul %63, %9, %cst_20 {dimension_numbers = #tpu.dot_dimension_numbers<[1], [0], [0], [1], [0, 0, 1, 1], [], []>} : vector<8x64xf32>, vector<64x256xf32>, vector<8x256xf32> -> vector<8x256xf32>
    %69 = arith.addf %67, %68 : vector<8x256xf32>
    %70 = math.tanh %69 : vector<8x256xf32>
    %71 = vector.broadcast %10 : vector<1x256xf32> to vector<8x256xf32>
    %72 = arith.mulf %70, %71 : vector<8x256xf32>
    %73 = vector.broadcast %11 : vector<1x256xf32> to vector<8x256xf32>
    %74 = arith.addf %72, %73 : vector<8x256xf32>
    %75 = vector.extract_strided_slice %74 {offsets = [0, 64], sizes = [8, 64], strides = [1, 1]} : vector<8x256xf32> to vector<8x64xf32>
    %76 = arith.mulf %75, %60 : vector<8x64xf32>
    %77 = vector.extract_strided_slice %74 {offsets = [0, 0], sizes = [8, 64], strides = [1, 1]} : vector<8x256xf32> to vector<8x64xf32>
    %78 = vector.extract_strided_slice %74 {offsets = [0, 128], sizes = [8, 64], strides = [1, 1]} : vector<8x256xf32> to vector<8x64xf32>
    %79 = arith.mulf %77, %78 : vector<8x64xf32>
    %80 = arith.addf %76, %79 : vector<8x64xf32>
    %81 = vector.extract_strided_slice %74 {offsets = [0, 192], sizes = [8, 64], strides = [1, 1]} : vector<8x256xf32> to vector<8x64xf32>
    %82 = math.tanh %80 : vector<8x64xf32>
    %83 = arith.mulf %81, %82 : vector<8x64xf32>
    %c4_i32 = arith.constant 4 : i32
    %c8_i32_21 = arith.constant 8 : i32
    %84 = arith.muli %c4_i32, %c8_i32_21 : i32
    %85 = tpu.assume_multiple %84, 8 : i32
    %86 = arith.index_cast %85 : i32 to index
    %c0_22 = arith.constant 0 : index
    %87 = vector.load %arg9[%86, %c0_22] : memref<128x256xf32, #tpu.memory_space<vmem>>, vector<8x256xf32>
    %cst_23 = arith.constant dense<0.000000e+00> : vector<8x256xf32>
    %88 = tpu.matmul %83, %9, %cst_23 {dimension_numbers = #tpu.dot_dimension_numbers<[1], [0], [0], [1], [0, 0, 1, 1], [], []>} : vector<8x64xf32>, vector<64x256xf32>, vector<8x256xf32> -> vector<8x256xf32>
    %89 = arith.addf %87, %88 : vector<8x256xf32>
    %90 = math.tanh %89 : vector<8x256xf32>
    %91 = vector.broadcast %10 : vector<1x256xf32> to vector<8x256xf32>
    %92 = arith.mulf %90, %91 : vector<8x256xf32>
    %93 = vector.broadcast %11 : vector<1x256xf32> to vector<8x256xf32>
    %94 = arith.addf %92, %93 : vector<8x256xf32>
    %95 = vector.extract_strided_slice %94 {offsets = [0, 64], sizes = [8, 64], strides = [1, 1]} : vector<8x256xf32> to vector<8x64xf32>
    %96 = arith.mulf %95, %80 : vector<8x64xf32>
    %97 = vector.extract_strided_slice %94 {offsets = [0, 0], sizes = [8, 64], strides = [1, 1]} : vector<8x256xf32> to vector<8x64xf32>
    %98 = vector.extract_strided_slice %94 {offsets = [0, 128], sizes = [8, 64], strides = [1, 1]} : vector<8x256xf32> to vector<8x64xf32>
    %99 = arith.mulf %97, %98 : vector<8x64xf32>
    %100 = arith.addf %96, %99 : vector<8x64xf32>
    %101 = vector.extract_strided_slice %94 {offsets = [0, 192], sizes = [8, 64], strides = [1, 1]} : vector<8x256xf32> to vector<8x64xf32>
    %102 = math.tanh %100 : vector<8x64xf32>
    %103 = arith.mulf %101, %102 : vector<8x64xf32>
    %c5_i32 = arith.constant 5 : i32
    %c8_i32_24 = arith.constant 8 : i32
    %104 = arith.muli %c5_i32, %c8_i32_24 : i32
    %105 = tpu.assume_multiple %104, 8 : i32
    %106 = arith.index_cast %105 : i32 to index
    %c0_25 = arith.constant 0 : index
    %107 = vector.load %arg9[%106, %c0_25] : memref<128x256xf32, #tpu.memory_space<vmem>>, vector<8x256xf32>
    %cst_26 = arith.constant dense<0.000000e+00> : vector<8x256xf32>
    %108 = tpu.matmul %103, %9, %cst_26 {dimension_numbers = #tpu.dot_dimension_numbers<[1], [0], [0], [1], [0, 0, 1, 1], [], []>} : vector<8x64xf32>, vector<64x256xf32>, vector<8x256xf32> -> vector<8x256xf32>
    %109 = arith.addf %107, %108 : vector<8x256xf32>
    %110 = math.tanh %109 : vector<8x256xf32>
    %111 = vector.broadcast %10 : vector<1x256xf32> to vector<8x256xf32>
    %112 = arith.mulf %110, %111 : vector<8x256xf32>
    %113 = vector.broadcast %11 : vector<1x256xf32> to vector<8x256xf32>
    %114 = arith.addf %112, %113 : vector<8x256xf32>
    %115 = vector.extract_strided_slice %114 {offsets = [0, 64], sizes = [8, 64], strides = [1, 1]} : vector<8x256xf32> to vector<8x64xf32>
    %116 = arith.mulf %115, %100 : vector<8x64xf32>
    %117 = vector.extract_strided_slice %114 {offsets = [0, 0], sizes = [8, 64], strides = [1, 1]} : vector<8x256xf32> to vector<8x64xf32>
    %118 = vector.extract_strided_slice %114 {offsets = [0, 128], sizes = [8, 64], strides = [1, 1]} : vector<8x256xf32> to vector<8x64xf32>
    %119 = arith.mulf %117, %118 : vector<8x64xf32>
    %120 = arith.addf %116, %119 : vector<8x64xf32>
    %121 = vector.extract_strided_slice %114 {offsets = [0, 192], sizes = [8, 64], strides = [1, 1]} : vector<8x256xf32> to vector<8x64xf32>
    %122 = math.tanh %120 : vector<8x64xf32>
    %123 = arith.mulf %121, %122 : vector<8x64xf32>
    %c6_i32 = arith.constant 6 : i32
    %c8_i32_27 = arith.constant 8 : i32
    %124 = arith.muli %c6_i32, %c8_i32_27 : i32
    %125 = tpu.assume_multiple %124, 8 : i32
    %126 = arith.index_cast %125 : i32 to index
    %c0_28 = arith.constant 0 : index
    %127 = vector.load %arg9[%126, %c0_28] : memref<128x256xf32, #tpu.memory_space<vmem>>, vector<8x256xf32>
    %cst_29 = arith.constant dense<0.000000e+00> : vector<8x256xf32>
    %128 = tpu.matmul %123, %9, %cst_29 {dimension_numbers = #tpu.dot_dimension_numbers<[1], [0], [0], [1], [0, 0, 1, 1], [], []>} : vector<8x64xf32>, vector<64x256xf32>, vector<8x256xf32> -> vector<8x256xf32>
    %129 = arith.addf %127, %128 : vector<8x256xf32>
    %130 = math.tanh %129 : vector<8x256xf32>
    %131 = vector.broadcast %10 : vector<1x256xf32> to vector<8x256xf32>
    %132 = arith.mulf %130, %131 : vector<8x256xf32>
    %133 = vector.broadcast %11 : vector<1x256xf32> to vector<8x256xf32>
    %134 = arith.addf %132, %133 : vector<8x256xf32>
    %135 = vector.extract_strided_slice %134 {offsets = [0, 64], sizes = [8, 64], strides = [1, 1]} : vector<8x256xf32> to vector<8x64xf32>
    %136 = arith.mulf %135, %120 : vector<8x64xf32>
    %137 = vector.extract_strided_slice %134 {offsets = [0, 0], sizes = [8, 64], strides = [1, 1]} : vector<8x256xf32> to vector<8x64xf32>
    %138 = vector.extract_strided_slice %134 {offsets = [0, 128], sizes = [8, 64], strides = [1, 1]} : vector<8x256xf32> to vector<8x64xf32>
    %139 = arith.mulf %137, %138 : vector<8x64xf32>
    %140 = arith.addf %136, %139 : vector<8x64xf32>
    %141 = vector.extract_strided_slice %134 {offsets = [0, 192], sizes = [8, 64], strides = [1, 1]} : vector<8x256xf32> to vector<8x64xf32>
    %142 = math.tanh %140 : vector<8x64xf32>
    %143 = arith.mulf %141, %142 : vector<8x64xf32>
    %c7_i32 = arith.constant 7 : i32
    %c8_i32_30 = arith.constant 8 : i32
    %144 = arith.muli %c7_i32, %c8_i32_30 : i32
    %145 = tpu.assume_multiple %144, 8 : i32
    %146 = arith.index_cast %145 : i32 to index
    %c0_31 = arith.constant 0 : index
    %147 = vector.load %arg9[%146, %c0_31] : memref<128x256xf32, #tpu.memory_space<vmem>>, vector<8x256xf32>
    %cst_32 = arith.constant dense<0.000000e+00> : vector<8x256xf32>
    %148 = tpu.matmul %143, %9, %cst_32 {dimension_numbers = #tpu.dot_dimension_numbers<[1], [0], [0], [1], [0, 0, 1, 1], [], []>} : vector<8x64xf32>, vector<64x256xf32>, vector<8x256xf32> -> vector<8x256xf32>
    %149 = arith.addf %147, %148 : vector<8x256xf32>
    %150 = math.tanh %149 : vector<8x256xf32>
    %151 = vector.broadcast %10 : vector<1x256xf32> to vector<8x256xf32>
    %152 = arith.mulf %150, %151 : vector<8x256xf32>
    %153 = vector.broadcast %11 : vector<1x256xf32> to vector<8x256xf32>
    %154 = arith.addf %152, %153 : vector<8x256xf32>
    %155 = vector.extract_strided_slice %154 {offsets = [0, 64], sizes = [8, 64], strides = [1, 1]} : vector<8x256xf32> to vector<8x64xf32>
    %156 = arith.mulf %155, %140 : vector<8x64xf32>
    %157 = vector.extract_strided_slice %154 {offsets = [0, 0], sizes = [8, 64], strides = [1, 1]} : vector<8x256xf32> to vector<8x64xf32>
    %158 = vector.extract_strided_slice %154 {offsets = [0, 128], sizes = [8, 64], strides = [1, 1]} : vector<8x256xf32> to vector<8x64xf32>
    %159 = arith.mulf %157, %158 : vector<8x64xf32>
    %160 = arith.addf %156, %159 : vector<8x64xf32>
    %161 = vector.extract_strided_slice %154 {offsets = [0, 192], sizes = [8, 64], strides = [1, 1]} : vector<8x256xf32> to vector<8x64xf32>
    %162 = math.tanh %160 : vector<8x64xf32>
    %163 = arith.mulf %161, %162 : vector<8x64xf32>
    %c8_i32_33 = arith.constant 8 : i32
    %c8_i32_34 = arith.constant 8 : i32
    %164 = arith.muli %c8_i32_33, %c8_i32_34 : i32
    %165 = tpu.assume_multiple %164, 8 : i32
    %166 = arith.index_cast %165 : i32 to index
    %c0_35 = arith.constant 0 : index
    %167 = vector.load %arg9[%166, %c0_35] : memref<128x256xf32, #tpu.memory_space<vmem>>, vector<8x256xf32>
    %cst_36 = arith.constant dense<0.000000e+00> : vector<8x256xf32>
    %168 = tpu.matmul %163, %9, %cst_36 {dimension_numbers = #tpu.dot_dimension_numbers<[1], [0], [0], [1], [0, 0, 1, 1], [], []>} : vector<8x64xf32>, vector<64x256xf32>, vector<8x256xf32> -> vector<8x256xf32>
    %169 = arith.addf %167, %168 : vector<8x256xf32>
    %170 = math.tanh %169 : vector<8x256xf32>
    %171 = vector.broadcast %10 : vector<1x256xf32> to vector<8x256xf32>
    %172 = arith.mulf %170, %171 : vector<8x256xf32>
    %173 = vector.broadcast %11 : vector<1x256xf32> to vector<8x256xf32>
    %174 = arith.addf %172, %173 : vector<8x256xf32>
    %175 = vector.extract_strided_slice %174 {offsets = [0, 64], sizes = [8, 64], strides = [1, 1]} : vector<8x256xf32> to vector<8x64xf32>
    %176 = arith.mulf %175, %160 : vector<8x64xf32>
    %177 = vector.extract_strided_slice %174 {offsets = [0, 0], sizes = [8, 64], strides = [1, 1]} : vector<8x256xf32> to vector<8x64xf32>
    %178 = vector.extract_strided_slice %174 {offsets = [0, 128], sizes = [8, 64], strides = [1, 1]} : vector<8x256xf32> to vector<8x64xf32>
    %179 = arith.mulf %177, %178 : vector<8x64xf32>
    %180 = arith.addf %176, %179 : vector<8x64xf32>
    %181 = vector.extract_strided_slice %174 {offsets = [0, 192], sizes = [8, 64], strides = [1, 1]} : vector<8x256xf32> to vector<8x64xf32>
    %182 = math.tanh %180 : vector<8x64xf32>
    %183 = arith.mulf %181, %182 : vector<8x64xf32>
    %c9_i32 = arith.constant 9 : i32
    %c8_i32_37 = arith.constant 8 : i32
    %184 = arith.muli %c9_i32, %c8_i32_37 : i32
    %185 = tpu.assume_multiple %184, 8 : i32
    %186 = arith.index_cast %185 : i32 to index
    %c0_38 = arith.constant 0 : index
    %187 = vector.load %arg9[%186, %c0_38] : memref<128x256xf32, #tpu.memory_space<vmem>>, vector<8x256xf32>
    %cst_39 = arith.constant dense<0.000000e+00> : vector<8x256xf32>
    %188 = tpu.matmul %183, %9, %cst_39 {dimension_numbers = #tpu.dot_dimension_numbers<[1], [0], [0], [1], [0, 0, 1, 1], [], []>} : vector<8x64xf32>, vector<64x256xf32>, vector<8x256xf32> -> vector<8x256xf32>
    %189 = arith.addf %187, %188 : vector<8x256xf32>
    %190 = math.tanh %189 : vector<8x256xf32>
    %191 = vector.broadcast %10 : vector<1x256xf32> to vector<8x256xf32>
    %192 = arith.mulf %190, %191 : vector<8x256xf32>
    %193 = vector.broadcast %11 : vector<1x256xf32> to vector<8x256xf32>
    %194 = arith.addf %192, %193 : vector<8x256xf32>
    %195 = vector.extract_strided_slice %194 {offsets = [0, 64], sizes = [8, 64], strides = [1, 1]} : vector<8x256xf32> to vector<8x64xf32>
    %196 = arith.mulf %195, %180 : vector<8x64xf32>
    %197 = vector.extract_strided_slice %194 {offsets = [0, 0], sizes = [8, 64], strides = [1, 1]} : vector<8x256xf32> to vector<8x64xf32>
    %198 = vector.extract_strided_slice %194 {offsets = [0, 128], sizes = [8, 64], strides = [1, 1]} : vector<8x256xf32> to vector<8x64xf32>
    %199 = arith.mulf %197, %198 : vector<8x64xf32>
    %200 = arith.addf %196, %199 : vector<8x64xf32>
    %201 = vector.extract_strided_slice %194 {offsets = [0, 192], sizes = [8, 64], strides = [1, 1]} : vector<8x256xf32> to vector<8x64xf32>
    %202 = math.tanh %200 : vector<8x64xf32>
    %203 = arith.mulf %201, %202 : vector<8x64xf32>
    %c10_i32 = arith.constant 10 : i32
    %c8_i32_40 = arith.constant 8 : i32
    %204 = arith.muli %c10_i32, %c8_i32_40 : i32
    %205 = tpu.assume_multiple %204, 8 : i32
    %206 = arith.index_cast %205 : i32 to index
    %c0_41 = arith.constant 0 : index
    %207 = vector.load %arg9[%206, %c0_41] : memref<128x256xf32, #tpu.memory_space<vmem>>, vector<8x256xf32>
    %cst_42 = arith.constant dense<0.000000e+00> : vector<8x256xf32>
    %208 = tpu.matmul %203, %9, %cst_42 {dimension_numbers = #tpu.dot_dimension_numbers<[1], [0], [0], [1], [0, 0, 1, 1], [], []>} : vector<8x64xf32>, vector<64x256xf32>, vector<8x256xf32> -> vector<8x256xf32>
    %209 = arith.addf %207, %208 : vector<8x256xf32>
    %210 = math.tanh %209 : vector<8x256xf32>
    %211 = vector.broadcast %10 : vector<1x256xf32> to vector<8x256xf32>
    %212 = arith.mulf %210, %211 : vector<8x256xf32>
    %213 = vector.broadcast %11 : vector<1x256xf32> to vector<8x256xf32>
    %214 = arith.addf %212, %213 : vector<8x256xf32>
    %215 = vector.extract_strided_slice %214 {offsets = [0, 64], sizes = [8, 64], strides = [1, 1]} : vector<8x256xf32> to vector<8x64xf32>
    %216 = arith.mulf %215, %200 : vector<8x64xf32>
    %217 = vector.extract_strided_slice %214 {offsets = [0, 0], sizes = [8, 64], strides = [1, 1]} : vector<8x256xf32> to vector<8x64xf32>
    %218 = vector.extract_strided_slice %214 {offsets = [0, 128], sizes = [8, 64], strides = [1, 1]} : vector<8x256xf32> to vector<8x64xf32>
    %219 = arith.mulf %217, %218 : vector<8x64xf32>
    %220 = arith.addf %216, %219 : vector<8x64xf32>
    %221 = vector.extract_strided_slice %214 {offsets = [0, 192], sizes = [8, 64], strides = [1, 1]} : vector<8x256xf32> to vector<8x64xf32>
    %222 = math.tanh %220 : vector<8x64xf32>
    %223 = arith.mulf %221, %222 : vector<8x64xf32>
    %c11_i32 = arith.constant 11 : i32
    %c8_i32_43 = arith.constant 8 : i32
    %224 = arith.muli %c11_i32, %c8_i32_43 : i32
    %225 = tpu.assume_multiple %224, 8 : i32
    %226 = arith.index_cast %225 : i32 to index
    %c0_44 = arith.constant 0 : index
    %227 = vector.load %arg9[%226, %c0_44] : memref<128x256xf32, #tpu.memory_space<vmem>>, vector<8x256xf32>
    %cst_45 = arith.constant dense<0.000000e+00> : vector<8x256xf32>
    %228 = tpu.matmul %223, %9, %cst_45 {dimension_numbers = #tpu.dot_dimension_numbers<[1], [0], [0], [1], [0, 0, 1, 1], [], []>} : vector<8x64xf32>, vector<64x256xf32>, vector<8x256xf32> -> vector<8x256xf32>
    %229 = arith.addf %227, %228 : vector<8x256xf32>
    %230 = math.tanh %229 : vector<8x256xf32>
    %231 = vector.broadcast %10 : vector<1x256xf32> to vector<8x256xf32>
    %232 = arith.mulf %230, %231 : vector<8x256xf32>
    %233 = vector.broadcast %11 : vector<1x256xf32> to vector<8x256xf32>
    %234 = arith.addf %232, %233 : vector<8x256xf32>
    %235 = vector.extract_strided_slice %234 {offsets = [0, 64], sizes = [8, 64], strides = [1, 1]} : vector<8x256xf32> to vector<8x64xf32>
    %236 = arith.mulf %235, %220 : vector<8x64xf32>
    %237 = vector.extract_strided_slice %234 {offsets = [0, 0], sizes = [8, 64], strides = [1, 1]} : vector<8x256xf32> to vector<8x64xf32>
    %238 = vector.extract_strided_slice %234 {offsets = [0, 128], sizes = [8, 64], strides = [1, 1]} : vector<8x256xf32> to vector<8x64xf32>
    %239 = arith.mulf %237, %238 : vector<8x64xf32>
    %240 = arith.addf %236, %239 : vector<8x64xf32>
    %241 = vector.extract_strided_slice %234 {offsets = [0, 192], sizes = [8, 64], strides = [1, 1]} : vector<8x256xf32> to vector<8x64xf32>
    %242 = math.tanh %240 : vector<8x64xf32>
    %243 = arith.mulf %241, %242 : vector<8x64xf32>
    %c12_i32 = arith.constant 12 : i32
    %c8_i32_46 = arith.constant 8 : i32
    %244 = arith.muli %c12_i32, %c8_i32_46 : i32
    %245 = tpu.assume_multiple %244, 8 : i32
    %246 = arith.index_cast %245 : i32 to index
    %c0_47 = arith.constant 0 : index
    %247 = vector.load %arg9[%246, %c0_47] : memref<128x256xf32, #tpu.memory_space<vmem>>, vector<8x256xf32>
    %cst_48 = arith.constant dense<0.000000e+00> : vector<8x256xf32>
    %248 = tpu.matmul %243, %9, %cst_48 {dimension_numbers = #tpu.dot_dimension_numbers<[1], [0], [0], [1], [0, 0, 1, 1], [], []>} : vector<8x64xf32>, vector<64x256xf32>, vector<8x256xf32> -> vector<8x256xf32>
    %249 = arith.addf %247, %248 : vector<8x256xf32>
    %250 = math.tanh %249 : vector<8x256xf32>
    %251 = vector.broadcast %10 : vector<1x256xf32> to vector<8x256xf32>
    %252 = arith.mulf %250, %251 : vector<8x256xf32>
    %253 = vector.broadcast %11 : vector<1x256xf32> to vector<8x256xf32>
    %254 = arith.addf %252, %253 : vector<8x256xf32>
    %255 = vector.extract_strided_slice %254 {offsets = [0, 64], sizes = [8, 64], strides = [1, 1]} : vector<8x256xf32> to vector<8x64xf32>
    %256 = arith.mulf %255, %240 : vector<8x64xf32>
    %257 = vector.extract_strided_slice %254 {offsets = [0, 0], sizes = [8, 64], strides = [1, 1]} : vector<8x256xf32> to vector<8x64xf32>
    %258 = vector.extract_strided_slice %254 {offsets = [0, 128], sizes = [8, 64], strides = [1, 1]} : vector<8x256xf32> to vector<8x64xf32>
    %259 = arith.mulf %257, %258 : vector<8x64xf32>
    %260 = arith.addf %256, %259 : vector<8x64xf32>
    %261 = vector.extract_strided_slice %254 {offsets = [0, 192], sizes = [8, 64], strides = [1, 1]} : vector<8x256xf32> to vector<8x64xf32>
    %262 = math.tanh %260 : vector<8x64xf32>
    %263 = arith.mulf %261, %262 : vector<8x64xf32>
    %c13_i32 = arith.constant 13 : i32
    %c8_i32_49 = arith.constant 8 : i32
    %264 = arith.muli %c13_i32, %c8_i32_49 : i32
    %265 = tpu.assume_multiple %264, 8 : i32
    %266 = arith.index_cast %265 : i32 to index
    %c0_50 = arith.constant 0 : index
    %267 = vector.load %arg9[%266, %c0_50] : memref<128x256xf32, #tpu.memory_space<vmem>>, vector<8x256xf32>
    %cst_51 = arith.constant dense<0.000000e+00> : vector<8x256xf32>
    %268 = tpu.matmul %263, %9, %cst_51 {dimension_numbers = #tpu.dot_dimension_numbers<[1], [0], [0], [1], [0, 0, 1, 1], [], []>} : vector<8x64xf32>, vector<64x256xf32>, vector<8x256xf32> -> vector<8x256xf32>
    %269 = arith.addf %267, %268 : vector<8x256xf32>
    %270 = math.tanh %269 : vector<8x256xf32>
    %271 = vector.broadcast %10 : vector<1x256xf32> to vector<8x256xf32>
    %272 = arith.mulf %270, %271 : vector<8x256xf32>
    %273 = vector.broadcast %11 : vector<1x256xf32> to vector<8x256xf32>
    %274 = arith.addf %272, %273 : vector<8x256xf32>
    %275 = vector.extract_strided_slice %274 {offsets = [0, 64], sizes = [8, 64], strides = [1, 1]} : vector<8x256xf32> to vector<8x64xf32>
    %276 = arith.mulf %275, %260 : vector<8x64xf32>
    %277 = vector.extract_strided_slice %274 {offsets = [0, 0], sizes = [8, 64], strides = [1, 1]} : vector<8x256xf32> to vector<8x64xf32>
    %278 = vector.extract_strided_slice %274 {offsets = [0, 128], sizes = [8, 64], strides = [1, 1]} : vector<8x256xf32> to vector<8x64xf32>
    %279 = arith.mulf %277, %278 : vector<8x64xf32>
    %280 = arith.addf %276, %279 : vector<8x64xf32>
    %281 = vector.extract_strided_slice %274 {offsets = [0, 192], sizes = [8, 64], strides = [1, 1]} : vector<8x256xf32> to vector<8x64xf32>
    %282 = math.tanh %280 : vector<8x64xf32>
    %283 = arith.mulf %281, %282 : vector<8x64xf32>
    %c14_i32 = arith.constant 14 : i32
    %c8_i32_52 = arith.constant 8 : i32
    %284 = arith.muli %c14_i32, %c8_i32_52 : i32
    %285 = tpu.assume_multiple %284, 8 : i32
    %286 = arith.index_cast %285 : i32 to index
    %c0_53 = arith.constant 0 : index
    %287 = vector.load %arg9[%286, %c0_53] : memref<128x256xf32, #tpu.memory_space<vmem>>, vector<8x256xf32>
    %cst_54 = arith.constant dense<0.000000e+00> : vector<8x256xf32>
    %288 = tpu.matmul %283, %9, %cst_54 {dimension_numbers = #tpu.dot_dimension_numbers<[1], [0], [0], [1], [0, 0, 1, 1], [], []>} : vector<8x64xf32>, vector<64x256xf32>, vector<8x256xf32> -> vector<8x256xf32>
    %289 = arith.addf %287, %288 : vector<8x256xf32>
    %290 = math.tanh %289 : vector<8x256xf32>
    %291 = vector.broadcast %10 : vector<1x256xf32> to vector<8x256xf32>
    %292 = arith.mulf %290, %291 : vector<8x256xf32>
    %293 = vector.broadcast %11 : vector<1x256xf32> to vector<8x256xf32>
    %294 = arith.addf %292, %293 : vector<8x256xf32>
    %295 = vector.extract_strided_slice %294 {offsets = [0, 64], sizes = [8, 64], strides = [1, 1]} : vector<8x256xf32> to vector<8x64xf32>
    %296 = arith.mulf %295, %280 : vector<8x64xf32>
    %297 = vector.extract_strided_slice %294 {offsets = [0, 0], sizes = [8, 64], strides = [1, 1]} : vector<8x256xf32> to vector<8x64xf32>
    %298 = vector.extract_strided_slice %294 {offsets = [0, 128], sizes = [8, 64], strides = [1, 1]} : vector<8x256xf32> to vector<8x64xf32>
    %299 = arith.mulf %297, %298 : vector<8x64xf32>
    %300 = arith.addf %296, %299 : vector<8x64xf32>
    %301 = vector.extract_strided_slice %294 {offsets = [0, 192], sizes = [8, 64], strides = [1, 1]} : vector<8x256xf32> to vector<8x64xf32>
    %302 = math.tanh %300 : vector<8x64xf32>
    %303 = arith.mulf %301, %302 : vector<8x64xf32>
    %c15_i32 = arith.constant 15 : i32
    %c8_i32_55 = arith.constant 8 : i32
    %304 = arith.muli %c15_i32, %c8_i32_55 : i32
    %305 = tpu.assume_multiple %304, 8 : i32
    %306 = arith.index_cast %305 : i32 to index
    %c0_56 = arith.constant 0 : index
    %307 = vector.load %arg9[%306, %c0_56] : memref<128x256xf32, #tpu.memory_space<vmem>>, vector<8x256xf32>
    %cst_57 = arith.constant dense<0.000000e+00> : vector<8x256xf32>
    %308 = tpu.matmul %303, %9, %cst_57 {dimension_numbers = #tpu.dot_dimension_numbers<[1], [0], [0], [1], [0, 0, 1, 1], [], []>} : vector<8x64xf32>, vector<64x256xf32>, vector<8x256xf32> -> vector<8x256xf32>
    %309 = arith.addf %307, %308 : vector<8x256xf32>
    %310 = math.tanh %309 : vector<8x256xf32>
    %311 = vector.broadcast %10 : vector<1x256xf32> to vector<8x256xf32>
    %312 = arith.mulf %310, %311 : vector<8x256xf32>
    %313 = vector.broadcast %11 : vector<1x256xf32> to vector<8x256xf32>
    %314 = arith.addf %312, %313 : vector<8x256xf32>
    %315 = vector.extract_strided_slice %314 {offsets = [0, 64], sizes = [8, 64], strides = [1, 1]} : vector<8x256xf32> to vector<8x64xf32>
    %316 = arith.mulf %315, %300 : vector<8x64xf32>
    %317 = vector.extract_strided_slice %314 {offsets = [0, 0], sizes = [8, 64], strides = [1, 1]} : vector<8x256xf32> to vector<8x64xf32>
    %318 = vector.extract_strided_slice %314 {offsets = [0, 128], sizes = [8, 64], strides = [1, 1]} : vector<8x256xf32> to vector<8x64xf32>
    %319 = arith.mulf %317, %318 : vector<8x64xf32>
    %320 = arith.addf %316, %319 : vector<8x64xf32>
    %321 = vector.extract_strided_slice %314 {offsets = [0, 192], sizes = [8, 64], strides = [1, 1]} : vector<8x256xf32> to vector<8x64xf32>
    %322 = math.tanh %320 : vector<8x64xf32>
    %323 = arith.mulf %321, %322 : vector<8x64xf32>
    %c15_i32_58 = arith.constant 15 : i32
    %c0_59 = arith.constant 0 : index
    %c0_60 = arith.constant 0 : index
    %324 = vector.load %arg6[%c0_59, %c0_60] : memref<1x64xf32, #tpu.memory_space<vmem>>, vector<1x64xf32>
    %325 = vector.broadcast %324 : vector<1x64xf32> to vector<8x64xf32>
    %326 = arith.mulf %323, %325 : vector<8x64xf32>
    %cst_61 = arith.constant dense<0.000000e+00> : vector<8xf32>
    %327 = vector.multi_reduction <add>, %326, %cst_61 [1] : vector<8x64xf32> to vector<8xf32>
    %328 = vector.shape_cast %327 : vector<8xf32> to vector<8x1xf32>
    %c0_62 = arith.constant 0 : index
    %329 = memref.load %arg7[%c0_62] : memref<1xf32, #tpu.memory_space<smem>>
    %330 = vector.broadcast %329 : f32 to vector<8x1xf32>
    %331 = arith.addf %328, %330 : vector<8x1xf32>
    %c0_63 = arith.constant 0 : index
    %c0_64 = arith.constant 0 : index
    %332 = vector.load %arg8[%c0_63, %c0_64] : memref<8x1xf32, #tpu.memory_space<vmem>>, vector<8x1xf32>
    tpu.vector_store %arg8[%c0_63, %c0_64], %331 {strides = array<i32>} : memref<8x1xf32, #tpu.memory_space<vmem>>, vector<8x1xf32>,
    return
  }
  func.func @transform_0(%arg0: i32) -> (i32, i32) {
    %c0_i32 = arith.constant 0 : i32
    %c0_i32_0 = arith.constant 0 : i32
    %c0_i32_1 = arith.constant 0 : i32
    return %c0_i32, %c0_i32_0 : i32, i32
  }
  func.func @transform_1(%arg0: i32) -> (i32, i32) {
    %c0_i32 = arith.constant 0 : i32
    %c0_i32_0 = arith.constant 0 : i32
    %c0_i32_1 = arith.constant 0 : i32
    return %c0_i32, %c0_i32_0 : i32, i32
  }
  func.func @transform_2(%arg0: i32) -> (i32, i32) {
    %c0_i32 = arith.constant 0 : i32
    %c0_i32_0 = arith.constant 0 : i32
    %c0_i32_1 = arith.constant 0 : i32
    return %c0_i32, %c0_i32_0 : i32, i32
  }
  func.func @transform_3(%arg0: i32) -> (i32, i32) {
    %c0_i32 = arith.constant 0 : i32
    %c0_i32_0 = arith.constant 0 : i32
    %c0_i32_1 = arith.constant 0 : i32
    return %c0_i32, %c0_i32_0 : i32, i32
  }
  func.func @transform_4(%arg0: i32) -> (i32, i32) {
    %c0_i32 = arith.constant 0 : i32
    %c0_i32_0 = arith.constant 0 : i32
    %c0_i32_1 = arith.constant 0 : i32
    return %c0_i32, %c0_i32_0 : i32, i32
  }
  func.func @transform_5(%arg0: i32) -> (i32, i32) {
    %c0_i32 = arith.constant 0 : i32
    %c0_i32_0 = arith.constant 0 : i32
    %c0_i32_1 = arith.constant 0 : i32
    return %c0_i32, %c0_i32_0 : i32, i32
  }
  func.func @transform_6(%arg0: i32) -> i32 {
    %c0_i32 = arith.constant 0 : i32
    %c0_i32_0 = arith.constant 0 : i32
    return %c0_i32 : i32
  }
  func.func @transform_7(%arg0: i32) -> (i32, i32) {
    %c0_i32 = arith.constant 0 : i32
    %c0_i32_0 = arith.constant 0 : i32
    %c0_i32_1 = arith.constant 0 : i32
    return %c0_i32, %c0_i32_0 : i32, i32
  }
}

</mosaic_0001>

<llo_original>
// kernel: tpu_custom_call.1
$region0: #{tpu_custom_call.1}
  #allocation0 [shape = 'u32[]', space=smem, size = 0x4, offset = 0x4, fixed_abs, tag = 'smem constant byte address 0x4 - core index']
  #allocation1 [shape = 'u32[144,128]{1,0:T(1,128)}', space=vmem, size = 0x12000, scoped, tag = 'internal scratch']
  #allocation2 [shape = 'f32[128,256]{1,0:T(8,128)}', space=vmem, size = 0x20000, scoped, tag = 'scratch operand']
  #allocation3 [shape = 'f32[1]{0:T(128)S(6)}', space=smem, size = 0x200, scoped, tag = 'scoped memory for tpu_custom_call.1']
  %s0 = inlined_call_operand.vmem [shape: f32[128,1], index: 0, kind: input, shape index: {}]
  %s1 = inlined_call_operand.vmem [shape: f32[1,256], index: 1, kind: input, shape index: {}]
  %s2 = inlined_call_operand.vmem [shape: f32[1,256], index: 2, kind: input, shape index: {}]
  %s3 = inlined_call_operand.vmem [shape: f32[64,256], index: 3, kind: input, shape index: {}]
  %s4 = inlined_call_operand.vmem [shape: f32[2,256], index: 4, kind: input, shape index: {}]
  %s5 = inlined_call_operand.vmem [shape: f32[1,64], index: 5, kind: input, shape index: {}]
  %s6 = inlined_call_operand.<no memory space> [shape: f32[1], index: 6, kind: input, shape index: {}]
  %s7 = inlined_call_operand.vmem [shape: f32[8,1], index: 7, kind: output, shape index: {}]
  %s8 = sld [smem:[#allocation0]]
  $region38: #{tpu_custom_call.1} parent=0
    _
  %s10 = ssub.s32 1, %s8
  %s11 = scalar_select 0, %s10, %s8
  %12 = sst [smem:[#allocation3]] %s6
  // Predicated region
  $region2: #{tpu_custom_call.1} parent=0 // pred_check
    _
  $region3: #{tpu_custom_call.1} parent=0 // pred_check_branch
    %14 = sbr.rel (0) target = $region5
  $region4: #{tpu_custom_call.1} parent=0 // pred_region
    _
  $region5: #{tpu_custom_call.1} parent=0 // pred_fallthru
    _
  // Predicated region
  $region6: #{tpu_custom_call.1} parent=0 // pred_check
    _
  $region7: #{tpu_custom_call.1} parent=0 // pred_check_branch
    %16 = sbr.rel (0) target = $region9
  $region8: #{tpu_custom_call.1} parent=0 // pred_region
    _
  $region9: #{tpu_custom_call.1} parent=0 // pred_fallthru
    _
  // Predicated region
  $region10: #{tpu_custom_call.1} parent=0 // pred_check
    _
  $region11: #{tpu_custom_call.1} parent=0 // pred_check_branch
    %18 = sbr.rel (0) target = $region13
  $region12: #{tpu_custom_call.1} parent=0 // pred_region
    _
  $region13: #{tpu_custom_call.1} parent=0 // pred_fallthru
    _
  // Predicated region
  $region14: #{tpu_custom_call.1} parent=0 // pred_check
    _
  $region15: #{tpu_custom_call.1} parent=0 // pred_check_branch
    %20 = sbr.rel (0) target = $region17
  $region16: #{tpu_custom_call.1} parent=0 // pred_region
    _
  $region17: #{tpu_custom_call.1} parent=0 // pred_fallthru
    _
  // Predicated region
  $region18: #{tpu_custom_call.1} parent=0 // pred_check
    _
  $region19: #{tpu_custom_call.1} parent=0 // pred_check_branch
    %22 = sbr.rel (0) target = $region21
  $region20: #{tpu_custom_call.1} parent=0 // pred_region
    _
  $region21: #{tpu_custom_call.1} parent=0 // pred_fallthru
    _
  // Predicated region
  $region22: #{tpu_custom_call.1} parent=0 // pred_check
    _
  $region23: #{tpu_custom_call.1} parent=0 // pred_check_branch
    %24 = sbr.rel (0) target = $region25
  $region24: #{tpu_custom_call.1} parent=0 // pred_region
    _
  $region25: #{tpu_custom_call.1} parent=0 // pred_fallthru
    _
  // Predicated region
  $region26: #{tpu_custom_call.1} parent=0 // pred_check
    _
  $region27: #{tpu_custom_call.1} parent=0 // pred_check_branch
    %26 = sbr.rel (0) target = $region29
  $region28: #{tpu_custom_call.1} parent=0 // pred_region
    _
  $region29: #{tpu_custom_call.1} parent=0 // pred_fallthru
    _
  %v27 = vld [vmem:[%s0] sm:$0xff]
  %v28 = vld [vmem:[%s0 + $0x8] sm:$0xff]
  %v29 = vld [vmem:[%s0 + $0x10] sm:$0xff]
  %v30 = vld [vmem:[%s0 + $0x18] sm:$0xff]
  %v31 = vld [vmem:[%s0 + $0x20] sm:$0xff]
  %v32 = vld [vmem:[%s0 + $0x28] sm:$0xff]
  %v33 = vld [vmem:[%s0 + $0x30] sm:$0xff]
  %v34 = vld [vmem:[%s0 + $0x38] sm:$0xff]
  %v35 = vld [vmem:[%s0 + $0x40] sm:$0xff]
  %v36 = vld [vmem:[%s0 + $0x48] sm:$0xff]
  %v37 = vld [vmem:[%s0 + $0x50] sm:$0xff]
  %v38 = vld [vmem:[%s0 + $0x58] sm:$0xff]
  %v39 = vld [vmem:[%s0 + $0x60] sm:$0xff]
  %v40 = vld [vmem:[%s0 + $0x68] sm:$0xff]
  %v41 = vld [vmem:[%s0 + $0x70] sm:$0xff]
  %v42 = vld [vmem:[%s0 + $0x78] sm:$0xff]
  %v43 = vld [vmem:[%s1] sm:$0x3]
  %45 = vset.pattern.permute.xlu0 0
  %46 = vperm.xlu0 %45, %v27
  %v47 = vpop.permute.xlu0 %46
  %50 = vset.pattern.permute.xlu0 0
  %51 = vperm.xlu0 %50, %v28
  %v52 = vpop.permute.xlu0 %51
  %55 = vset.pattern.permute.xlu0 0
  %56 = vperm.xlu0 %55, %v29
  %v57 = vpop.permute.xlu0 %56
  %60 = vset.pattern.permute.xlu0 0
  %61 = vperm.xlu0 %60, %v30
  %v62 = vpop.permute.xlu0 %61
  %65 = vset.pattern.permute.xlu0 0
  %66 = vperm.xlu0 %65, %v31
  %v67 = vpop.permute.xlu0 %66
  %70 = vset.pattern.permute.xlu0 0
  %71 = vperm.xlu0 %70, %v32
  %v72 = vpop.permute.xlu0 %71
  %75 = vset.pattern.permute.xlu0 0
  %76 = vperm.xlu0 %75, %v33
  %v77 = vpop.permute.xlu0 %76
  %80 = vset.pattern.permute.xlu0 0
  %81 = vperm.xlu0 %80, %v34
  %v82 = vpop.permute.xlu0 %81
  %85 = vset.pattern.permute.xlu0 0
  %86 = vperm.xlu0 %85, %v35
  %v87 = vpop.permute.xlu0 %86
  %90 = vset.pattern.permute.xlu0 0
  %91 = vperm.xlu0 %90, %v36
  %v92 = vpop.permute.xlu0 %91
  %95 = vset.pattern.permute.xlu0 0
  %96 = vperm.xlu0 %95, %v37
  %v97 = vpop.permute.xlu0 %96
  %100 = vset.pattern.permute.xlu0 0
  %101 = vperm.xlu0 %100, %v38
  %v102 = vpop.permute.xlu0 %101
  %105 = vset.pattern.permute.xlu0 0
  %106 = vperm.xlu0 %105, %v39
  %v107 = vpop.permute.xlu0 %106
  %110 = vset.pattern.permute.xlu0 0
  %111 = vperm.xlu0 %110, %v40
  %v112 = vpop.permute.xlu0 %111
  %115 = vset.pattern.permute.xlu0 0
  %116 = vperm.xlu0 %115, %v41
  %v117 = vpop.permute.xlu0 %116
  %120 = vset.pattern.permute.xlu0 0
  %121 = vperm.xlu0 %120, %v42
  %v122 = vpop.permute.xlu0 %121
  %v125 = vlaneseq
  %v126 = vshrl.u32 %v125, 7
  %v127 = vsub.s32 0, %v126
  %v128 = vrot.slane %v43, %v127
  %v129 = vlaneseq
  %v130 = vshrl.u32 %v129, 7
  %v131 = vsub.s32 1, %v130
  %v132 = vrot.slane %v43, %v131
  %v135 = vmul.f32 %v47, %v128
  %v136 = vmul.f32 %v47, %v132
  %v137 = vmul.f32 %v52, %v128
  %v138 = vmul.f32 %v52, %v132
  %v139 = vmul.f32 %v57, %v128
  %v140 = vmul.f32 %v57, %v132
  %v141 = vmul.f32 %v62, %v128
  %v142 = vmul.f32 %v62, %v132
  %v143 = vmul.f32 %v67, %v128
  %v144 = vmul.f32 %v67, %v132
  %v145 = vmul.f32 %v72, %v128
  %v146 = vmul.f32 %v72, %v132
  %v147 = vmul.f32 %v77, %v128
  %v148 = vmul.f32 %v77, %v132
  %v149 = vmul.f32 %v82, %v128
  %v150 = vmul.f32 %v82, %v132
  %v151 = vmul.f32 %v87, %v128
  %v152 = vmul.f32 %v87, %v132
  %v153 = vmul.f32 %v92, %v128
  %v154 = vmul.f32 %v92, %v132
  %v155 = vmul.f32 %v97, %v128
  %v156 = vmul.f32 %v97, %v132
  %v157 = vmul.f32 %v102, %v128
  %v158 = vmul.f32 %v102, %v132
  %v159 = vmul.f32 %v107, %v128
  %v160 = vmul.f32 %v107, %v132
  %v161 = vmul.f32 %v112, %v128
  %v162 = vmul.f32 %v112, %v132
  %v163 = vmul.f32 %v117, %v128
  %v164 = vmul.f32 %v117, %v132
  %v165 = vmul.f32 %v122, %v128
  %v166 = vmul.f32 %v122, %v132
  %v167 = vld [vmem:[%s2] sm:$0x3]
  %v169 = vlaneseq
  %v170 = vshrl.u32 %v169, 7
  %v171 = vsub.s32 0, %v170
  %v172 = vrot.slane %v167, %v171
  %v173 = vlaneseq
  %v174 = vshrl.u32 %v173, 7
  %v175 = vsub.s32 1, %v174
  %v176 = vrot.slane %v167, %v175
  %v179 = vadd.f32 %v135, %v172
  %v180 = vadd.f32 %v136, %v176
  %v181 = vadd.f32 %v137, %v172
  %v182 = vadd.f32 %v138, %v176
  %v183 = vadd.f32 %v139, %v172
  %v184 = vadd.f32 %v140, %v176
  %v185 = vadd.f32 %v141, %v172
  %v186 = vadd.f32 %v142, %v176
  %v187 = vadd.f32 %v143, %v172
  %v188 = vadd.f32 %v144, %v176
  %v189 = vadd.f32 %v145, %v172
  %v190 = vadd.f32 %v146, %v176
  %v191 = vadd.f32 %v147, %v172
  %v192 = vadd.f32 %v148, %v176
  %v193 = vadd.f32 %v149, %v172
  %v194 = vadd.f32 %v150, %v176
  %v195 = vadd.f32 %v151, %v172
  %v196 = vadd.f32 %v152, %v176
  %v197 = vadd.f32 %v153, %v172
  %v198 = vadd.f32 %v154, %v176
  %v199 = vadd.f32 %v155, %v172
  %v200 = vadd.f32 %v156, %v176
  %v201 = vadd.f32 %v157, %v172
  %v202 = vadd.f32 %v158, %v176
  %v203 = vadd.f32 %v159, %v172
  %v204 = vadd.f32 %v160, %v176
  %v205 = vadd.f32 %v161, %v172
  %v206 = vadd.f32 %v162, %v176
  %v207 = vadd.f32 %v163, %v172
  %v208 = vadd.f32 %v164, %v176
  %v209 = vadd.f32 %v165, %v172
  %v210 = vadd.f32 %v166, %v176
  %211 = vst [vmem:[#allocation2] sm:$0xff] %v179
  %212 = vst [vmem:[#allocation2 + $0x8] sm:$0xff] %v180
  %213 = vst [vmem:[#allocation2 + $0x10] sm:$0xff] %v181
  %214 = vst [vmem:[#allocation2 + $0x18] sm:$0xff] %v182
  %215 = vst [vmem:[#allocation2 + $0x20] sm:$0xff] %v183
  %216 = vst [vmem:[#allocation2 + $0x28] sm:$0xff] %v184
  %217 = vst [vmem:[#allocation2 + $0x30] sm:$0xff] %v185
  %218 = vst [vmem:[#allocation2 + $0x38] sm:$0xff] %v186
  %219 = vst [vmem:[#allocation2 + $0x40] sm:$0xff] %v187
  %220 = vst [vmem:[#allocation2 + $0x48] sm:$0xff] %v188
  %221 = vst [vmem:[#allocation2 + $0x50] sm:$0xff] %v189
  %222 = vst [vmem:[#allocation2 + $0x58] sm:$0xff] %v190
  %223 = vst [vmem:[#allocation2 + $0x60] sm:$0xff] %v191
  %224 = vst [vmem:[#allocation2 + $0x68] sm:$0xff] %v192
  %225 = vst [vmem:[#allocation2 + $0x70] sm:$0xff] %v193
  %226 = vst [vmem:[#allocation2 + $0x78] sm:$0xff] %v194
  %227 = vst [vmem:[#allocation2 + $0x80] sm:$0xff] %v195
  %228 = vst [vmem:[#allocation2 + $0x88] sm:$0xff] %v196
  %229 = vst [vmem:[#allocation2 + $0x90] sm:$0xff] %v197
  %230 = vst [vmem:[#allocation2 + $0x98] sm:$0xff] %v198
  %231 = vst [vmem:[#allocation2 + $0xa0] sm:$0xff] %v199
  %232 = vst [vmem:[#allocation2 + $0xa8] sm:$0xff] %v200
  %233 = vst [vmem:[#allocation2 + $0xb0] sm:$0xff] %v201
  %234 = vst [vmem:[#allocation2 + $0xb8] sm:$0xff] %v202
  %235 = vst [vmem:[#allocation2 + $0xc0] sm:$0xff] %v203
  %236 = vst [vmem:[#allocation2 + $0xc8] sm:$0xff] %v204
  %237 = vst [vmem:[#allocation2 + $0xd0] sm:$0xff] %v205
  %238 = vst [vmem:[#allocation2 + $0xd8] sm:$0xff] %v206
  %239 = vst [vmem:[#allocation2 + $0xe0] sm:$0xff] %v207
  %240 = vst [vmem:[#allocation2 + $0xe8] sm:$0xff] %v208
  %241 = vst [vmem:[#allocation2 + $0xf0] sm:$0xff] %v209
  %242 = vst [vmem:[#allocation2 + $0xf8] sm:$0xff] %v210
  %v243 = vld [vmem:[%s3] sm:$0xff]
  %v244 = vld [vmem:[%s3 + $0x8] sm:$0xff]
  %v245 = vld [vmem:[%s3 + $0x10] sm:$0xff]
  %v246 = vld [vmem:[%s3 + $0x18] sm:$0xff]
  %v247 = vld [vmem:[%s3 + $0x20] sm:$0xff]
  %v248 = vld [vmem:[%s3 + $0x28] sm:$0xff]
  %v249 = vld [vmem:[%s3 + $0x30] sm:$0xff]
  %v250 = vld [vmem:[%s3 + $0x38] sm:$0xff]
  %v251 = vld [vmem:[%s3 + $0x40] sm:$0xff]
  %v252 = vld [vmem:[%s3 + $0x48] sm:$0xff]
  %v253 = vld [vmem:[%s3 + $0x50] sm:$0xff]
  %v254 = vld [vmem:[%s3 + $0x58] sm:$0xff]
  %v255 = vld [vmem:[%s3 + $0x60] sm:$0xff]
  %v256 = vld [vmem:[%s3 + $0x68] sm:$0xff]
  %v257 = vld [vmem:[%s3 + $0x70] sm:$0xff]
  %v258 = vld [vmem:[%s3 + $0x78] sm:$0xff]
  %v259 = vld [vmem:[%s4] ss:$2 sm:$0x3]
  %s260 = scalar_lea.vmem %s4, 1
  %v261 = vld [vmem:[%s260] ss:$2 sm:$0x3]
  %v262 = vld [vmem:[#allocation2] sm:$0xff]
  %v263 = vld [vmem:[#allocation2 + $0x8] sm:$0xff]
  %v264 = vtanh.pop %v262
  %v265 = vtanh.pop %v263
  %v267 = vlaneseq
  %v268 = vshrl.u32 %v267, 7
  %v269 = vsub.s32 0, %v268
  %v270 = vrot.slane %v259, %v269
  %v271 = vlaneseq
  %v272 = vshrl.u32 %v271, 7
  %v273 = vsub.s32 1, %v272
  %v274 = vrot.slane %v259, %v273
  %v277 = vmul.f32 %v264, %v270
  %v278 = vmul.f32 %v265, %v274
  %v280 = vlaneseq
  %v281 = vshrl.u32 %v280, 7
  %v282 = vsub.s32 0, %v281
  %v283 = vrot.slane %v261, %v282
  %v284 = vlaneseq
  %v285 = vshrl.u32 %v284, 7
  %v286 = vsub.s32 1, %v285
  %v287 = vrot.slane %v261, %v286
  %v290 = vadd.f32 %v277, %v283
  %v291 = vadd.f32 %v278, %v287
  %v292 = vmul.f32 %v290, %v291
  %v293 = vtanh.pop %v292
  %295 = vrot.lane.b32.xlu0 %v293, 64
  %v296 = vpop.permute.xlu0 %295
  %v298 = vmul.f32 %v291, %v296
  %s299 = smul.u32 1, 2
  %s300 = smul.addr %s299, 8
  %s301 = scalar_lea.vmem [#allocation2], %s300
  %v302 = vld [vmem:[%s301] sm:$0xff]
  %v303 = vld [vmem:[%s301 + $0x8] sm:$0xff]
  %305 = vrot.lane.b32.xlu0 %v298, 64
  %v306 = vpop.permute.xlu0 %305
  %vm307 = vcmask 523264
  %v308 = vsel %vm307, %v306, 0
  %310 = vmatprep.subr.mxu0 %v244
  %311 = vmatpush1.msra.mxu0 %v243
  %312 = vmatprep.subr.mxu0 %v246
  %313 = vmatpush1.msra.mxu0 %v245
  %314 = vmatprep.subr.mxu0 %v248
  %315 = vmatpush1.msra.mxu0 %v247
  %316 = vmatprep.subr.mxu0 %v250
  %317 = vmatpush1.msra.mxu0 %v249
  %318 = vmatprep.subr.mxu0 %v252
  %319 = vmatpush1.msra.mxu0 %v251
  %320 = vmatprep.subr.mxu0 %v254
  %321 = vmatpush1.msra.mxu0 %v253
  %322 = vmatprep.subr.mxu0 %v256
  %323 = vmatpush1.msra.mxu0 %v255
  %324 = vmatprep.subr.mxu0 %v258
  %325 = vmatpush1.msra.mxu0 %v257
  %326 = vmatprep.subr.mxu0 0.0
  %327 = vmatpush1.msra.mxu0 0.0
  %328 = vmatprep.subr.mxu0 0.0
  %329 = vmatpush1.msra.mxu0 0.0
  %330 = vmatprep.subr.mxu0 0.0
  %331 = vmatpush1.msra.mxu0 0.0
  %332 = vmatprep.subr.mxu0 0.0
  %333 = vmatpush1.msra.mxu0 0.0
  %334 = vmatprep.subr.mxu0 0.0
  %335 = vmatpush1.msra.mxu0 0.0
  %336 = vmatprep.subr.mxu0 0.0
  %337 = vmatpush1.msra.mxu0 0.0
  %338 = vmatprep.subr.mxu0 0.0
  %339 = vmatpush1.msra.mxu0 0.0
  %340 = vmatprep.subr.mxu0 0.0
  %341 = vmatpush1.msra.mxu0 0.0
  %342 = vmatprep.subr.mxu0 0.0
  %343 = vmatpush1.msra.mxu0 0.0
  %344 = vmatprep.subr.mxu0 0.0
  %345 = vmatpush1.msra.mxu0 0.0
  %346 = vmatprep.subr.mxu0 0.0
  %347 = vmatpush1.msra.mxu0 0.0
  %348 = vmatprep.subr.mxu0 0.0
  %349 = vmatpush1.msra.mxu0 0.0
  %350 = vmatprep.subr.mxu0 0.0
  %351 = vmatpush1.msra.mxu0 0.0
  %352 = vmatprep.subr.mxu0 0.0
  %353 = vmatpush1.msra.mxu0 0.0
  %354 = vmatprep.subr.mxu0 0.0
  %355 = vmatpush1.msra.mxu0 0.0
  %356 = vmatprep.subr.mxu0 0.0
  %357 = vmatpush1.msra.mxu0 0.0
  %358 = vmatprep.subr.mxu0 0.0
  %359 = vmatpush1.msra.mxu0 0.0
  %360 = vmatprep.subr.mxu0 0.0
  %361 = vmatpush1.msra.mxu0 0.0
  %362 = vmatprep.subr.mxu0 0.0
  %363 = vmatpush1.msra.mxu0 0.0
  %364 = vmatprep.subr.mxu0 0.0
  %365 = vmatpush1.msra.mxu0 0.0
  %366 = vmatprep.subr.mxu0 0.0
  %367 = vmatpush1.msra.mxu0 0.0
  %368 = vmatprep.subr.mxu0 0.0
  %369 = vmatpush1.msra.mxu0 0.0
  %370 = vmatprep.subr.mxu0 0.0
  %371 = vmatpush1.msra.mxu0 0.0
  %372 = vmatprep.subr.mxu0 0.0
  %373 = vmatpush1.msra.mxu0 0.0
  %374 = vmatprep.mubr.f32.mxu0 0.0
  %375 = vmatmul.mubr.f32.gmra.mrb[0].mxu0 %v308
  %v376 = vpop.f32.mrb[0].mxu0
  %v377 = vadd.f32 0.0, %v376
  %v378 = vpop.f32.mrb[0].mxu0
  %v379 = vadd.f32 0.0, %v378
  %380 = vdwg.mxu0
  %v381 = vadd.f32 %v302, %v377
  %v382 = vadd.f32 %v303, %v379
  %v383 = vtanh.pop %v381
  %v384 = vtanh.pop %v382
  %v385 = vmul.f32 %v383, %v270
  %v386 = vmul.f32 %v384, %v274
  %v387 = vadd.f32 %v385, %v283
  %v388 = vadd.f32 %v386, %v287
  %390 = vrot.lane.b32.xlu0 %v292, 64
  %v391 = vpop.permute.xlu0 %390
  %v393 = vmul.f32 %v387, %v391
  %v394 = vmul.f32 %v387, %v388
  %396 = vrot.lane.b32.xlu0 %v394, 64
  %v397 = vpop.permute.xlu0 %396
  %v399 = vadd.f32 %v393, %v397
  %v400 = vtanh.pop %v399
  %v401 = vmul.f32 %v388, %v400
  %s402 = smul.u32 2, 2
  %s403 = smul.addr %s402, 8
  %s404 = scalar_lea.vmem [#allocation2], %s403
  %v405 = vld [vmem:[%s404] sm:$0xff]
  %v406 = vld [vmem:[%s404 + $0x8] sm:$0xff]
  %408 = vrot.lane.b32.xlu0 %v401, 64
  %v409 = vpop.permute.xlu0 %408
  %v410 = vsel %vm307, %v409, 0
  %412 = vmatprep.subr.mxu0 %v244
  %413 = vmatpush1.msra.mxu0 %v243
  %414 = vmatprep.subr.mxu0 %v246
  %415 = vmatpush1.msra.mxu0 %v245
  %416 = vmatprep.subr.mxu0 %v248
  %417 = vmatpush1.msra.mxu0 %v247
  %418 = vmatprep.subr.mxu0 %v250
  %419 = vmatpush1.msra.mxu0 %v249
  %420 = vmatprep.subr.mxu0 %v252
  %421 = vmatpush1.msra.mxu0 %v251
  %422 = vmatprep.subr.mxu0 %v254
  %423 = vmatpush1.msra.mxu0 %v253
  %424 = vmatprep.subr.mxu0 %v256
  %425 = vmatpush1.msra.mxu0 %v255
  %426 = vmatprep.subr.mxu0 %v258
  %427 = vmatpush1.msra.mxu0 %v257
  %428 = vmatprep.subr.mxu0 0.0
  %429 = vmatpush1.msra.mxu0 0.0
  %430 = vmatprep.subr.mxu0 0.0
  %431 = vmatpush1.msra.mxu0 0.0
  %432 = vmatprep.subr.mxu0 0.0
  %433 = vmatpush1.msra.mxu0 0.0
  %434 = vmatprep.subr.mxu0 0.0
  %435 = vmatpush1.msra.mxu0 0.0
  %436 = vmatprep.subr.mxu0 0.0
  %437 = vmatpush1.msra.mxu0 0.0
  %438 = vmatprep.subr.mxu0 0.0
  %439 = vmatpush1.msra.mxu0 0.0
  %440 = vmatprep.subr.mxu0 0.0
  %441 = vmatpush1.msra.mxu0 0.0
  %442 = vmatprep.subr.mxu0 0.0
  %443 = vmatpush1.msra.mxu0 0.0
  %444 = vmatprep.subr.mxu0 0.0
  %445 = vmatpush1.msra.mxu0 0.0
  %446 = vmatprep.subr.mxu0 0.0
  %447 = vmatpush1.msra.mxu0 0.0
  %448 = vmatprep.subr.mxu0 0.0
  %449 = vmatpush1.msra.mxu0 0.0
  %450 = vmatprep.subr.mxu0 0.0
  %451 = vmatpush1.msra.mxu0 0.0
  %452 = vmatprep.subr.mxu0 0.0
  %453 = vmatpush1.msra.mxu0 0.0
  %454 = vmatprep.subr.mxu0 0.0
  %455 = vmatpush1.msra.mxu0 0.0
  %456 = vmatprep.subr.mxu0 0.0
  %457 = vmatpush1.msra.mxu0 0.0
  %458 = vmatprep.subr.mxu0 0.0
  %459 = vmatpush1.msra.mxu0 0.0
  %460 = vmatprep.subr.mxu0 0.0
  %461 = vmatpush1.msra.mxu0 0.0
  %462 = vmatprep.subr.mxu0 0.0
  %463 = vmatpush1.msra.mxu0 0.0
  %464 = vmatprep.subr.mxu0 0.0
  %465 = vmatpush1.msra.mxu0 0.0
  %466 = vmatprep.subr.mxu0 0.0
  %467 = vmatpush1.msra.mxu0 0.0
  %468 = vmatprep.subr.mxu0 0.0
  %469 = vmatpush1.msra.mxu0 0.0
  %470 = vmatprep.subr.mxu0 0.0
  %471 = vmatpush1.msra.mxu0 0.0
  %472 = vmatprep.subr.mxu0 0.0
  %473 = vmatpush1.msra.mxu0 0.0
  %474 = vmatprep.subr.mxu0 0.0
  %475 = vmatpush1.msra.mxu0 0.0
  %476 = vmatprep.mubr.f32.mxu0 0.0
  %477 = vmatmul.mubr.f32.gmra.mrb[0].mxu0 %v410
  %v478 = vpop.f32.mrb[0].mxu0
  %v479 = vadd.f32 0.0, %v478
  %v480 = vpop.f32.mrb[0].mxu0
  %v481 = vadd.f32 0.0, %v480
  %482 = vdwg.mxu0
  %v483 = vadd.f32 %v405, %v479
  %v484 = vadd.f32 %v406, %v481
  %v485 = vtanh.pop %v483
  %v486 = vtanh.pop %v484
  %v487 = vmul.f32 %v485, %v270
  %v488 = vmul.f32 %v486, %v274
  %v489 = vadd.f32 %v487, %v283
  %v490 = vadd.f32 %v488, %v287
  %v491 = vmul.f32 %v489, %v399
  %v492 = vmul.f32 %v489, %v490
  %494 = vrot.lane.b32.xlu0 %v492, 64
  %v495 = vpop.permute.xlu0 %494
  %v497 = vadd.f32 %v491, %v495
  %v498 = vtanh.pop %v497
  %v499 = vmul.f32 %v490, %v498
  %s500 = smul.u32 3, 2
  %s501 = smul.addr %s500, 8
  %s502 = scalar_lea.vmem [#allocation2], %s501
  %v503 = vld [vmem:[%s502] sm:$0xff]
  %v504 = vld [vmem:[%s502 + $0x8] sm:$0xff]
  %506 = vrot.lane.b32.xlu0 %v499, 64
  %v507 = vpop.permute.xlu0 %506
  %v508 = vsel %vm307, %v507, 0
  %510 = vmatprep.subr.mxu0 %v244
  %511 = vmatpush1.msra.mxu0 %v243
  %512 = vmatprep.subr.mxu0 %v246
  %513 = vmatpush1.msra.mxu0 %v245
  %514 = vmatprep.subr.mxu0 %v248
  %515 = vmatpush1.msra.mxu0 %v247
  %516 = vmatprep.subr.mxu0 %v250
  %517 = vmatpush1.msra.mxu0 %v249
  %518 = vmatprep.subr.mxu0 %v252
  %519 = vmatpush1.msra.mxu0 %v251
  %520 = vmatprep.subr.mxu0 %v254
  %521 = vmatpush1.msra.mxu0 %v253
  %522 = vmatprep.subr.mxu0 %v256
  %523 = vmatpush1.msra.mxu0 %v255
  %524 = vmatprep.subr.mxu0 %v258
  %525 = vmatpush1.msra.mxu0 %v257
  %526 = vmatprep.subr.mxu0 0.0
  %527 = vmatpush1.msra.mxu0 0.0
  %528 = vmatprep.subr.mxu0 0.0
  %529 = vmatpush1.msra.mxu0 0.0
  %530 = vmatprep.subr.mxu0 0.0
  %531 = vmatpush1.msra.mxu0 0.0
  %532 = vmatprep.subr.mxu0 0.0
  %533 = vmatpush1.msra.mxu0 0.0
  %534 = vmatprep.subr.mxu0 0.0
  %535 = vmatpush1.msra.mxu0 0.0
  %536 = vmatprep.subr.mxu0 0.0
  %537 = vmatpush1.msra.mxu0 0.0
  %538 = vmatprep.subr.mxu0 0.0
  %539 = vmatpush1.msra.mxu0 0.0
  %540 = vmatprep.subr.mxu0 0.0
  %541 = vmatpush1.msra.mxu0 0.0
  %542 = vmatprep.subr.mxu0 0.0
  %543 = vmatpush1.msra.mxu0 0.0
  %544 = vmatprep.subr.mxu0 0.0
  %545 = vmatpush1.msra.mxu0 0.0
  %546 = vmatprep.subr.mxu0 0.0
  %547 = vmatpush1.msra.mxu0 0.0
  %548 = vmatprep.subr.mxu0 0.0
  %549 = vmatpush1.msra.mxu0 0.0
  %550 = vmatprep.subr.mxu0 0.0
  %551 = vmatpush1.msra.mxu0 0.0
  %552 = vmatprep.subr.mxu0 0.0
  %553 = vmatpush1.msra.mxu0 0.0
  %554 = vmatprep.subr.mxu0 0.0
  %555 = vmatpush1.msra.mxu0 0.0
  %556 = vmatprep.subr.mxu0 0.0
  %557 = vmatpush1.msra.mxu0 0.0
  %558 = vmatprep.subr.mxu0 0.0
  %559 = vmatpush1.msra.mxu0 0.0
  %560 = vmatprep.subr.mxu0 0.0
  %561 = vmatpush1.msra.mxu0 0.0
  %562 = vmatprep.subr.mxu0 0.0
  %563 = vmatpush1.msra.mxu0 0.0
  %564 = vmatprep.subr.mxu0 0.0
  %565 = vmatpush1.msra.mxu0 0.0
  %566 = vmatprep.subr.mxu0 0.0
  %567 = vmatpush1.msra.mxu0 0.0
  %568 = vmatprep.subr.mxu0 0.0
  %569 = vmatpush1.msra.mxu0 0.0
  %570 = vmatprep.subr.mxu0 0.0
  %571 = vmatpush1.msra.mxu0 0.0
  %572 = vmatprep.subr.mxu0 0.0
  %573 = vmatpush1.msra.mxu0 0.0
  %574 = vmatprep.mubr.f32.mxu0 0.0
  %575 = vmatmul.mubr.f32.gmra.mrb[0].mxu0 %v508
  %v576 = vpop.f32.mrb[0].mxu0
  %v577 = vadd.f32 0.0, %v576
  %v578 = vpop.f32.mrb[0].mxu0
  %v579 = vadd.f32 0.0, %v578
  %580 = vdwg.mxu0
  %v581 = vadd.f32 %v503, %v577
  %v582 = vadd.f32 %v504, %v579
  %v583 = vtanh.pop %v581
  %v584 = vtanh.pop %v582
  %v585 = vmul.f32 %v583, %v270
  %v586 = vmul.f32 %v584, %v274
  %v587 = vadd.f32 %v585, %v283
  %v588 = vadd.f32 %v586, %v287
  %v589 = vmul.f32 %v587, %v497
  %v590 = vmul.f32 %v587, %v588
  %592 = vrot.lane.b32.xlu0 %v590, 64
  %v593 = vpop.permute.xlu0 %592
  %v595 = vadd.f32 %v589, %v593
  %v596 = vtanh.pop %v595
  %v597 = vmul.f32 %v588, %v596
  %s598 = smul.u32 4, 2
  %s599 = smul.addr %s598, 8
  %s600 = scalar_lea.vmem [#allocation2], %s599
  %v601 = vld [vmem:[%s600] sm:$0xff]
  %v602 = vld [vmem:[%s600 + $0x8] sm:$0xff]
  %604 = vrot.lane.b32.xlu0 %v597, 64
  %v605 = vpop.permute.xlu0 %604
  %v606 = vsel %vm307, %v605, 0
  %608 = vmatprep.subr.mxu0 %v244
  %609 = vmatpush1.msra.mxu0 %v243
  %610 = vmatprep.subr.mxu0 %v246
  %611 = vmatpush1.msra.mxu0 %v245
  %612 = vmatprep.subr.mxu0 %v248
  %613 = vmatpush1.msra.mxu0 %v247
  %614 = vmatprep.subr.mxu0 %v250
  %615 = vmatpush1.msra.mxu0 %v249
  %616 = vmatprep.subr.mxu0 %v252
  %617 = vmatpush1.msra.mxu0 %v251
  %618 = vmatprep.subr.mxu0 %v254
  %619 = vmatpush1.msra.mxu0 %v253
  %620 = vmatprep.subr.mxu0 %v256
  %621 = vmatpush1.msra.mxu0 %v255
  %622 = vmatprep.subr.mxu0 %v258
  %623 = vmatpush1.msra.mxu0 %v257
  %624 = vmatprep.subr.mxu0 0.0
  %625 = vmatpush1.msra.mxu0 0.0
  %626 = vmatprep.subr.mxu0 0.0
  %627 = vmatpush1.msra.mxu0 0.0
  %628 = vmatprep.subr.mxu0 0.0
  %629 = vmatpush1.msra.mxu0 0.0
  %630 = vmatprep.subr.mxu0 0.0
  %631 = vmatpush1.msra.mxu0 0.0
  %632 = vmatprep.subr.mxu0 0.0
  %633 = vmatpush1.msra.mxu0 0.0
  %634 = vmatprep.subr.mxu0 0.0
  %635 = vmatpush1.msra.mxu0 0.0
  %636 = vmatprep.subr.mxu0 0.0
  %637 = vmatpush1.msra.mxu0 0.0
  %638 = vmatprep.subr.mxu0 0.0
  %639 = vmatpush1.msra.mxu0 0.0
  %640 = vmatprep.subr.mxu0 0.0
  %641 = vmatpush1.msra.mxu0 0.0
  %642 = vmatprep.subr.mxu0 0.0
  %643 = vmatpush1.msra.mxu0 0.0
  %644 = vmatprep.subr.mxu0 0.0
  %645 = vmatpush1.msra.mxu0 0.0
  %646 = vmatprep.subr.mxu0 0.0
  %647 = vmatpush1.msra.mxu0 0.0
  %648 = vmatprep.subr.mxu0 0.0
  %649 = vmatpush1.msra.mxu0 0.0
  %650 = vmatprep.subr.mxu0 0.0
  %651 = vmatpush1.msra.mxu0 0.0
  %652 = vmatprep.subr.mxu0 0.0
  %653 = vmatpush1.msra.mxu0 0.0
  %654 = vmatprep.subr.mxu0 0.0
  %655 = vmatpush1.msra.mxu0 0.0
  %656 = vmatprep.subr.mxu0 0.0
  %657 = vmatpush1.msra.mxu0 0.0
  %658 = vmatprep.subr.mxu0 0.0
  %659 = vmatpush1.msra.mxu0 0.0
  %660 = vmatprep.subr.mxu0 0.0
  %661 = vmatpush1.msra.mxu0 0.0
  %662 = vmatprep.subr.mxu0 0.0
  %663 = vmatpush1.msra.mxu0 0.0
  %664 = vmatprep.subr.mxu0 0.0
  %665 = vmatpush1.msra.mxu0 0.0
  %666 = vmatprep.subr.mxu0 0.0
  %667 = vmatpush1.msra.mxu0 0.0
  %668 = vmatprep.subr.mxu0 0.0
  %669 = vmatpush1.msra.mxu0 0.0
  %670 = vmatprep.subr.mxu0 0.0
  %671 = vmatpush1.msra.mxu0 0.0
  %672 = vmatprep.mubr.f32.mxu0 0.0
  %673 = vmatmul.mubr.f32.gmra.mrb[0].mxu0 %v606
  %v674 = vpop.f32.mrb[0].mxu0
  %v675 = vadd.f32 0.0, %v674
  %v676 = vpop.f32.mrb[0].mxu0
  %v677 = vadd.f32 0.0, %v676
  %678 = vdwg.mxu0
  %v679 = vadd.f32 %v601, %v675
  %v680 = vadd.f32 %v602, %v677
  %v681 = vtanh.pop %v679
  %v682 = vtanh.pop %v680
  %v683 = vmul.f32 %v681, %v270
  %v684 = vmul.f32 %v682, %v274
  %v685 = vadd.f32 %v683, %v283
  %v686 = vadd.f32 %v684, %v287
  %v687 = vmul.f32 %v685, %v595
  %v688 = vmul.f32 %v685, %v686
  %690 = vrot.lane.b32.xlu0 %v688, 64
  %v691 = vpop.permute.xlu0 %690
  %v693 = vadd.f32 %v687, %v691
  %v694 = vtanh.pop %v693
  %v695 = vmul.f32 %v686, %v694
  %s696 = smul.u32 5, 2
  %s697 = smul.addr %s696, 8
  %s698 = scalar_lea.vmem [#allocation2], %s697
  %v699 = vld [vmem:[%s698] sm:$0xff]
  %v700 = vld [vmem:[%s698 + $0x8] sm:$0xff]
  %702 = vrot.lane.b32.xlu0 %v695, 64
  %v703 = vpop.permute.xlu0 %702
  %v704 = vsel %vm307, %v703, 0
  %706 = vmatprep.subr.mxu0 %v244
  %707 = vmatpush1.msra.mxu0 %v243
  %708 = vmatprep.subr.mxu0 %v246
  %709 = vmatpush1.msra.mxu0 %v245
  %710 = vmatprep.subr.mxu0 %v248
  %711 = vmatpush1.msra.mxu0 %v247
  %712 = vmatprep.subr.mxu0 %v250
  %713 = vmatpush1.msra.mxu0 %v249
  %714 = vmatprep.subr.mxu0 %v252
  %715 = vmatpush1.msra.mxu0 %v251
  %716 = vmatprep.subr.mxu0 %v254
  %717 = vmatpush1.msra.mxu0 %v253
  %718 = vmatprep.subr.mxu0 %v256
  %719 = vmatpush1.msra.mxu0 %v255
  %720 = vmatprep.subr.mxu0 %v258
  %721 = vmatpush1.msra.mxu0 %v257
  %722 = vmatprep.subr.mxu0 0.0
  %723 = vmatpush1.msra.mxu0 0.0
  %724 = vmatprep.subr.mxu0 0.0
  %725 = vmatpush1.msra.mxu0 0.0
  %726 = vmatprep.subr.mxu0 0.0
  %727 = vmatpush1.msra.mxu0 0.0
  %728 = vmatprep.subr.mxu0 0.0
  %729 = vmatpush1.msra.mxu0 0.0
  %730 = vmatprep.subr.mxu0 0.0
  %731 = vmatpush1.msra.mxu0 0.0
  %732 = vmatprep.subr.mxu0 0.0
  %733 = vmatpush1.msra.mxu0 0.0
  %734 = vmatprep.subr.mxu0 0.0
  %735 = vmatpush1.msra.mxu0 0.0
  %736 = vmatprep.subr.mxu0 0.0
  %737 = vmatpush1.msra.mxu0 0.0
  %738 = vmatprep.subr.mxu0 0.0
  %739 = vmatpush1.msra.mxu0 0.0
  %740 = vmatprep.subr.mxu0 0.0
  %741 = vmatpush1.msra.mxu0 0.0
  %742 = vmatprep.subr.mxu0 0.0
  %743 = vmatpush1.msra.mxu0 0.0
  %744 = vmatprep.subr.mxu0 0.0
  %745 = vmatpush1.msra.mxu0 0.0
  %746 = vmatprep.subr.mxu0 0.0
  %747 = vmatpush1.msra.mxu0 0.0
  %748 = vmatprep.subr.mxu0 0.0
  %749 = vmatpush1.msra.mxu0 0.0
  %750 = vmatprep.subr.mxu0 0.0
  %751 = vmatpush1.msra.mxu0 0.0
  %752 = vmatprep.subr.mxu0 0.0
  %753 = vmatpush1.msra.mxu0 0.0
  %754 = vmatprep.subr.mxu0 0.0
  %755 = vmatpush1.msra.mxu0 0.0
  %756 = vmatprep.subr.mxu0 0.0
  %757 = vmatpush1.msra.mxu0 0.0
  %758 = vmatprep.subr.mxu0 0.0
  %759 = vmatpush1.msra.mxu0 0.0
  %760 = vmatprep.subr.mxu0 0.0
  %761 = vmatpush1.msra.mxu0 0.0
  %762 = vmatprep.subr.mxu0 0.0
  %763 = vmatpush1.msra.mxu0 0.0
  %764 = vmatprep.subr.mxu0 0.0
  %765 = vmatpush1.msra.mxu0 0.0
  %766 = vmatprep.subr.mxu0 0.0
  %767 = vmatpush1.msra.mxu0 0.0
  %768 = vmatprep.subr.mxu0 0.0
  %769 = vmatpush1.msra.mxu0 0.0
  %770 = vmatprep.mubr.f32.mxu0 0.0
  %771 = vmatmul.mubr.f32.gmra.mrb[0].mxu0 %v704
  %v772 = vpop.f32.mrb[0].mxu0
  %v773 = vadd.f32 0.0, %v772
  %v774 = vpop.f32.mrb[0].mxu0
  %v775 = vadd.f32 0.0, %v774
  %776 = vdwg.mxu0
  %v777 = vadd.f32 %v699, %v773
  %v778 = vadd.f32 %v700, %v775
  %v779 = vtanh.pop %v777
  %v780 = vtanh.pop %v778
  %v781 = vmul.f32 %v779, %v270
  %v782 = vmul.f32 %v780, %v274
  %v783 = vadd.f32 %v781, %v283
  %v784 = vadd.f32 %v782, %v287
  %v785 = vmul.f32 %v783, %v693
  %v786 = vmul.f32 %v783, %v784
  %788 = vrot.lane.b32.xlu0 %v786, 64
  %v789 = vpop.permute.xlu0 %788
  %v791 = vadd.f32 %v785, %v789
  %v792 = vtanh.pop %v791
  %v793 = vmul.f32 %v784, %v792
  %s794 = smul.u32 6, 2
  %s795 = smul.addr %s794, 8
  %s796 = scalar_lea.vmem [#allocation2], %s795
  %v797 = vld [vmem:[%s796] sm:$0xff]
  %v798 = vld [vmem:[%s796 + $0x8] sm:$0xff]
  %800 = vrot.lane.b32.xlu0 %v793, 64
  %v801 = vpop.permute.xlu0 %800
  %v802 = vsel %vm307, %v801, 0
  %804 = vmatprep.subr.mxu0 %v244
  %805 = vmatpush1.msra.mxu0 %v243
  %806 = vmatprep.subr.mxu0 %v246
  %807 = vmatpush1.msra.mxu0 %v245
  %808 = vmatprep.subr.mxu0 %v248
  %809 = vmatpush1.msra.mxu0 %v247
  %810 = vmatprep.subr.mxu0 %v250
  %811 = vmatpush1.msra.mxu0 %v249
  %812 = vmatprep.subr.mxu0 %v252
  %813 = vmatpush1.msra.mxu0 %v251
  %814 = vmatprep.subr.mxu0 %v254
  %815 = vmatpush1.msra.mxu0 %v253
  %816 = vmatprep.subr.mxu0 %v256
  %817 = vmatpush1.msra.mxu0 %v255
  %818 = vmatprep.subr.mxu0 %v258
  %819 = vmatpush1.msra.mxu0 %v257
  %820 = vmatprep.subr.mxu0 0.0
  %821 = vmatpush1.msra.mxu0 0.0
  %822 = vmatprep.subr.mxu0 0.0
  %823 = vmatpush1.msra.mxu0 0.0
  %824 = vmatprep.subr.mxu0 0.0
  %825 = vmatpush1.msra.mxu0 0.0
  %826 = vmatprep.subr.mxu0 0.0
  %827 = vmatpush1.msra.mxu0 0.0
  %828 = vmatprep.subr.mxu0 0.0
  %829 = vmatpush1.msra.mxu0 0.0
  %830 = vmatprep.subr.mxu0 0.0
  %831 = vmatpush1.msra.mxu0 0.0
  %832 = vmatprep.subr.mxu0 0.0
  %833 = vmatpush1.msra.mxu0 0.0
  %834 = vmatprep.subr.mxu0 0.0
  %835 = vmatpush1.msra.mxu0 0.0
  %836 = vmatprep.subr.mxu0 0.0
  %837 = vmatpush1.msra.mxu0 0.0
  %838 = vmatprep.subr.mxu0 0.0
  %839 = vmatpush1.msra.mxu0 0.0
  %840 = vmatprep.subr.mxu0 0.0
  %841 = vmatpush1.msra.mxu0 0.0
  %842 = vmatprep.subr.mxu0 0.0
  %843 = vmatpush1.msra.mxu0 0.0
  %844 = vmatprep.subr.mxu0 0.0
  %845 = vmatpush1.msra.mxu0 0.0
  %846 = vmatprep.subr.mxu0 0.0
  %847 = vmatpush1.msra.mxu0 0.0
  %848 = vmatprep.subr.mxu0 0.0
  %849 = vmatpush1.msra.mxu0 0.0
  %850 = vmatprep.subr.mxu0 0.0
  %851 = vmatpush1.msra.mxu0 0.0
  %852 = vmatprep.subr.mxu0 0.0
  %853 = vmatpush1.msra.mxu0 0.0
  %854 = vmatprep.subr.mxu0 0.0
  %855 = vmatpush1.msra.mxu0 0.0
  %856 = vmatprep.subr.mxu0 0.0
  %857 = vmatpush1.msra.mxu0 0.0
  %858 = vmatprep.subr.mxu0 0.0
  %859 = vmatpush1.msra.mxu0 0.0
  %860 = vmatprep.subr.mxu0 0.0
  %861 = vmatpush1.msra.mxu0 0.0
  %862 = vmatprep.subr.mxu0 0.0
  %863 = vmatpush1.msra.mxu0 0.0
  %864 = vmatprep.subr.mxu0 0.0
  %865 = vmatpush1.msra.mxu0 0.0
  %866 = vmatprep.subr.mxu0 0.0
  %867 = vmatpush1.msra.mxu0 0.0
  %868 = vmatprep.mubr.f32.mxu0 0.0
  %869 = vmatmul.mubr.f32.gmra.mrb[0].mxu0 %v802
  %v870 = vpop.f32.mrb[0].mxu0
  %v871 = vadd.f32 0.0, %v870
  %v872 = vpop.f32.mrb[0].mxu0
  %v873 = vadd.f32 0.0, %v872
  %874 = vdwg.mxu0
  %v875 = vadd.f32 %v797, %v871
  %v876 = vadd.f32 %v798, %v873
  %v877 = vtanh.pop %v875
  %v878 = vtanh.pop %v876
  %v879 = vmul.f32 %v877, %v270
  %v880 = vmul.f32 %v878, %v274
  %v881 = vadd.f32 %v879, %v283
  %v882 = vadd.f32 %v880, %v287
  %v883 = vmul.f32 %v881, %v791
  %v884 = vmul.f32 %v881, %v882
  %886 = vrot.lane.b32.xlu0 %v884, 64
  %v887 = vpop.permute.xlu0 %886
  %v889 = vadd.f32 %v883, %v887
  %v890 = vtanh.pop %v889
  %v891 = vmul.f32 %v882, %v890
  %s892 = smul.u32 7, 2
  %s893 = smul.addr %s892, 8
  %s894 = scalar_lea.vmem [#allocation2], %s893
  %v895 = vld [vmem:[%s894] sm:$0xff]
  %v896 = vld [vmem:[%s894 + $0x8] sm:$0xff]
  %898 = vrot.lane.b32.xlu0 %v891, 64
  %v899 = vpop.permute.xlu0 %898
  %v900 = vsel %vm307, %v899, 0
  %902 = vmatprep.subr.mxu0 %v244
  %903 = vmatpush1.msra.mxu0 %v243
  %904 = vmatprep.subr.mxu0 %v246
  %905 = vmatpush1.msra.mxu0 %v245
  %906 = vmatprep.subr.mxu0 %v248
  %907 = vmatpush1.msra.mxu0 %v247
  %908 = vmatprep.subr.mxu0 %v250
  %909 = vmatpush1.msra.mxu0 %v249
  %910 = vmatprep.subr.mxu0 %v252
  %911 = vmatpush1.msra.mxu0 %v251
  %912 = vmatprep.subr.mxu0 %v254
  %913 = vmatpush1.msra.mxu0 %v253
  %914 = vmatprep.subr.mxu0 %v256
  %915 = vmatpush1.msra.mxu0 %v255
  %916 = vmatprep.subr.mxu0 %v258
  %917 = vmatpush1.msra.mxu0 %v257
  %918 = vmatprep.subr.mxu0 0.0
  %919 = vmatpush1.msra.mxu0 0.0
  %920 = vmatprep.subr.mxu0 0.0
  %921 = vmatpush1.msra.mxu0 0.0
  %922 = vmatprep.subr.mxu0 0.0
  %923 = vmatpush1.msra.mxu0 0.0
  %924 = vmatprep.subr.mxu0 0.0
  %925 = vmatpush1.msra.mxu0 0.0
  %926 = vmatprep.subr.mxu0 0.0
  %927 = vmatpush1.msra.mxu0 0.0
  %928 = vmatprep.subr.mxu0 0.0
  %929 = vmatpush1.msra.mxu0 0.0
  %930 = vmatprep.subr.mxu0 0.0
  %931 = vmatpush1.msra.mxu0 0.0
  %932 = vmatprep.subr.mxu0 0.0
  %933 = vmatpush1.msra.mxu0 0.0
  %934 = vmatprep.subr.mxu0 0.0
  %935 = vmatpush1.msra.mxu0 0.0
  %936 = vmatprep.subr.mxu0 0.0
  %937 = vmatpush1.msra.mxu0 0.0
  %938 = vmatprep.subr.mxu0 0.0
  %939 = vmatpush1.msra.mxu0 0.0
  %940 = vmatprep.subr.mxu0 0.0
  %941 = vmatpush1.msra.mxu0 0.0
  %942 = vmatprep.subr.mxu0 0.0
  %943 = vmatpush1.msra.mxu0 0.0
  %944 = vmatprep.subr.mxu0 0.0
  %945 = vmatpush1.msra.mxu0 0.0
  %946 = vmatprep.subr.mxu0 0.0
  %947 = vmatpush1.msra.mxu0 0.0
  %948 = vmatprep.subr.mxu0 0.0
  %949 = vmatpush1.msra.mxu0 0.0
  %950 = vmatprep.subr.mxu0 0.0
  %951 = vmatpush1.msra.mxu0 0.0
  %952 = vmatprep.subr.mxu0 0.0
  %953 = vmatpush1.msra.mxu0 0.0
  %954 = vmatprep.subr.mxu0 0.0
  %955 = vmatpush1.msra.mxu0 0.0
  %956 = vmatprep.subr.mxu0 0.0
  %957 = vmatpush1.msra.mxu0 0.0
  %958 = vmatprep.subr.mxu0 0.0
  %959 = vmatpush1.msra.mxu0 0.0
  %960 = vmatprep.subr.mxu0 0.0
  %961 = vmatpush1.msra.mxu0 0.0
  %962 = vmatprep.subr.mxu0 0.0
  %963 = vmatpush1.msra.mxu0 0.0
  %964 = vmatprep.subr.mxu0 0.0
  %965 = vmatpush1.msra.mxu0 0.0
  %966 = vmatprep.mubr.f32.mxu0 0.0
  %967 = vmatmul.mubr.f32.gmra.mrb[0].mxu0 %v900
  %v968 = vpop.f32.mrb[0].mxu0
  %v969 = vadd.f32 0.0, %v968
  %v970 = vpop.f32.mrb[0].mxu0
  %v971 = vadd.f32 0.0, %v970
  %972 = vdwg.mxu0
  %v973 = vadd.f32 %v895, %v969
  %v974 = vadd.f32 %v896, %v971
  %v975 = vtanh.pop %v973
  %v976 = vtanh.pop %v974
  %v977 = vmul.f32 %v975, %v270
  %v978 = vmul.f32 %v976, %v274
  %v979 = vadd.f32 %v977, %v283
  %v980 = vadd.f32 %v978, %v287
  %v981 = vmul.f32 %v979, %v889
  %v982 = vmul.f32 %v979, %v980
  %984 = vrot.lane.b32.xlu0 %v982, 64
  %v985 = vpop.permute.xlu0 %984
  %v987 = vadd.f32 %v981, %v985
  %v988 = vtanh.pop %v987
  %v989 = vmul.f32 %v980, %v988
  %s990 = smul.u32 8, 2
  %s991 = smul.addr %s990, 8
  %s992 = scalar_lea.vmem [#allocation2], %s991
  %v993 = vld [vmem:[%s992] sm:$0xff]
  %v994 = vld [vmem:[%s992 + $0x8] sm:$0xff]
  %996 = vrot.lane.b32.xlu0 %v989, 64
  %v997 = vpop.permute.xlu0 %996
  %v998 = vsel %vm307, %v997, 0
  %1000 = vmatprep.subr.mxu0 %v244
  %1001 = vmatpush1.msra.mxu0 %v243
  %1002 = vmatprep.subr.mxu0 %v246
  %1003 = vmatpush1.msra.mxu0 %v245
  %1004 = vmatprep.subr.mxu0 %v248
  %1005 = vmatpush1.msra.mxu0 %v247
  %1006 = vmatprep.subr.mxu0 %v250
  %1007 = vmatpush1.msra.mxu0 %v249
  %1008 = vmatprep.subr.mxu0 %v252
  %1009 = vmatpush1.msra.mxu0 %v251
  %1010 = vmatprep.subr.mxu0 %v254
  %1011 = vmatpush1.msra.mxu0 %v253
  %1012 = vmatprep.subr.mxu0 %v256
  %1013 = vmatpush1.msra.mxu0 %v255
  %1014 = vmatprep.subr.mxu0 %v258
  %1015 = vmatpush1.msra.mxu0 %v257
  %1016 = vmatprep.subr.mxu0 0.0
  %1017 = vmatpush1.msra.mxu0 0.0
  %1018 = vmatprep.subr.mxu0 0.0
  %1019 = vmatpush1.msra.mxu0 0.0
  %1020 = vmatprep.subr.mxu0 0.0
  %1021 = vmatpush1.msra.mxu0 0.0
  %1022 = vmatprep.subr.mxu0 0.0
  %1023 = vmatpush1.msra.mxu0 0.0
  %1024 = vmatprep.subr.mxu0 0.0
  %1025 = vmatpush1.msra.mxu0 0.0
  %1026 = vmatprep.subr.mxu0 0.0
  %1027 = vmatpush1.msra.mxu0 0.0
  %1028 = vmatprep.subr.mxu0 0.0
  %1029 = vmatpush1.msra.mxu0 0.0
  %1030 = vmatprep.subr.mxu0 0.0
  %1031 = vmatpush1.msra.mxu0 0.0
  %1032 = vmatprep.subr.mxu0 0.0
  %1033 = vmatpush1.msra.mxu0 0.0
  %1034 = vmatprep.subr.mxu0 0.0
  %1035 = vmatpush1.msra.mxu0 0.0
  %1036 = vmatprep.subr.mxu0 0.0
  %1037 = vmatpush1.msra.mxu0 0.0
  %1038 = vmatprep.subr.mxu0 0.0
  %1039 = vmatpush1.msra.mxu0 0.0
  %1040 = vmatprep.subr.mxu0 0.0
  %1041 = vmatpush1.msra.mxu0 0.0
  %1042 = vmatprep.subr.mxu0 0.0
  %1043 = vmatpush1.msra.mxu0 0.0
  %1044 = vmatprep.subr.mxu0 0.0
  %1045 = vmatpush1.msra.mxu0 0.0
  %1046 = vmatprep.subr.mxu0 0.0
  %1047 = vmatpush1.msra.mxu0 0.0
  %1048 = vmatprep.subr.mxu0 0.0
  %1049 = vmatpush1.msra.mxu0 0.0
  %1050 = vmatprep.subr.mxu0 0.0
  %1051 = vmatpush1.msra.mxu0 0.0
  %1052 = vmatprep.subr.mxu0 0.0
  %1053 = vmatpush1.msra.mxu0 0.0
  %1054 = vmatprep.subr.mxu0 0.0
  %1055 = vmatpush1.msra.mxu0 0.0
  %1056 = vmatprep.subr.mxu0 0.0
  %1057 = vmatpush1.msra.mxu0 0.0
  %1058 = vmatprep.subr.mxu0 0.0
  %1059 = vmatpush1.msra.mxu0 0.0
  %1060 = vmatprep.subr.mxu0 0.0
  %1061 = vmatpush1.msra.mxu0 0.0
  %1062 = vmatprep.subr.mxu0 0.0
  %1063 = vmatpush1.msra.mxu0 0.0
  %1064 = vmatprep.mubr.f32.mxu0 0.0
  %1065 = vmatmul.mubr.f32.gmra.mrb[0].mxu0 %v998
  %v1066 = vpop.f32.mrb[0].mxu0
  %v1067 = vadd.f32 0.0, %v1066
  %v1068 = vpop.f32.mrb[0].mxu0
  %v1069 = vadd.f32 0.0, %v1068
  %1070 = vdwg.mxu0
  %v1071 = vadd.f32 %v993, %v1067
  %v1072 = vadd.f32 %v994, %v1069
  %v1073 = vtanh.pop %v1071
  %v1074 = vtanh.pop %v1072
  %v1075 = vmul.f32 %v1073, %v270
  %v1076 = vmul.f32 %v1074, %v274
  %v1077 = vadd.f32 %v1075, %v283
  %v1078 = vadd.f32 %v1076, %v287
  %v1079 = vmul.f32 %v1077, %v987
  %v1080 = vmul.f32 %v1077, %v1078
  %1082 = vrot.lane.b32.xlu0 %v1080, 64
  %v1083 = vpop.permute.xlu0 %1082
  %v1085 = vadd.f32 %v1079, %v1083
  %v1086 = vtanh.pop %v1085
  %v1087 = vmul.f32 %v1078, %v1086
  %s1088 = smul.u32 9, 2
  %s1089 = smul.addr %s1088, 8
  %s1090 = scalar_lea.vmem [#allocation2], %s1089
  %v1091 = vld [vmem:[%s1090] sm:$0xff]
  %v1092 = vld [vmem:[%s1090 + $0x8] sm:$0xff]
  %1094 = vrot.lane.b32.xlu0 %v1087, 64
  %v1095 = vpop.permute.xlu0 %1094
  %v1096 = vsel %vm307, %v1095, 0
  %1098 = vmatprep.subr.mxu0 %v244
  %1099 = vmatpush1.msra.mxu0 %v243
  %1100 = vmatprep.subr.mxu0 %v246
  %1101 = vmatpush1.msra.mxu0 %v245
  %1102 = vmatprep.subr.mxu0 %v248
  %1103 = vmatpush1.msra.mxu0 %v247
  %1104 = vmatprep.subr.mxu0 %v250
  %1105 = vmatpush1.msra.mxu0 %v249
  %1106 = vmatprep.subr.mxu0 %v252
  %1107 = vmatpush1.msra.mxu0 %v251
  %1108 = vmatprep.subr.mxu0 %v254
  %1109 = vmatpush1.msra.mxu0 %v253
  %1110 = vmatprep.subr.mxu0 %v256
  %1111 = vmatpush1.msra.mxu0 %v255
  %1112 = vmatprep.subr.mxu0 %v258
  %1113 = vmatpush1.msra.mxu0 %v257
  %1114 = vmatprep.subr.mxu0 0.0
  %1115 = vmatpush1.msra.mxu0 0.0
  %1116 = vmatprep.subr.mxu0 0.0
  %1117 = vmatpush1.msra.mxu0 0.0
  %1118 = vmatprep.subr.mxu0 0.0
  %1119 = vmatpush1.msra.mxu0 0.0
  %1120 = vmatprep.subr.mxu0 0.0
  %1121 = vmatpush1.msra.mxu0 0.0
  %1122 = vmatprep.subr.mxu0 0.0
  %1123 = vmatpush1.msra.mxu0 0.0
  %1124 = vmatprep.subr.mxu0 0.0
  %1125 = vmatpush1.msra.mxu0 0.0
  %1126 = vmatprep.subr.mxu0 0.0
  %1127 = vmatpush1.msra.mxu0 0.0
  %1128 = vmatprep.subr.mxu0 0.0
  %1129 = vmatpush1.msra.mxu0 0.0
  %1130 = vmatprep.subr.mxu0 0.0
  %1131 = vmatpush1.msra.mxu0 0.0
  %1132 = vmatprep.subr.mxu0 0.0
  %1133 = vmatpush1.msra.mxu0 0.0
  %1134 = vmatprep.subr.mxu0 0.0
  %1135 = vmatpush1.msra.mxu0 0.0
  %1136 = vmatprep.subr.mxu0 0.0
  %1137 = vmatpush1.msra.mxu0 0.0
  %1138 = vmatprep.subr.mxu0 0.0
  %1139 = vmatpush1.msra.mxu0 0.0
  %1140 = vmatprep.subr.mxu0 0.0
  %1141 = vmatpush1.msra.mxu0 0.0
  %1142 = vmatprep.subr.mxu0 0.0
  %1143 = vmatpush1.msra.mxu0 0.0
  %1144 = vmatprep.subr.mxu0 0.0
  %1145 = vmatpush1.msra.mxu0 0.0
  %1146 = vmatprep.subr.mxu0 0.0
  %1147 = vmatpush1.msra.mxu0 0.0
  %1148 = vmatprep.subr.mxu0 0.0
  %1149 = vmatpush1.msra.mxu0 0.0
  %1150 = vmatprep.subr.mxu0 0.0
  %1151 = vmatpush1.msra.mxu0 0.0
  %1152 = vmatprep.subr.mxu0 0.0
  %1153 = vmatpush1.msra.mxu0 0.0
  %1154 = vmatprep.subr.mxu0 0.0
  %1155 = vmatpush1.msra.mxu0 0.0
  %1156 = vmatprep.subr.mxu0 0.0
  %1157 = vmatpush1.msra.mxu0 0.0
  %1158 = vmatprep.subr.mxu0 0.0
  %1159 = vmatpush1.msra.mxu0 0.0
  %1160 = vmatprep.subr.mxu0 0.0
  %1161 = vmatpush1.msra.mxu0 0.0
  %1162 = vmatprep.mubr.f32.mxu0 0.0
  %1163 = vmatmul.mubr.f32.gmra.mrb[0].mxu0 %v1096
  %v1164 = vpop.f32.mrb[0].mxu0
  %v1165 = vadd.f32 0.0, %v1164
  %v1166 = vpop.f32.mrb[0].mxu0
  %v1167 = vadd.f32 0.0, %v1166
  %1168 = vdwg.mxu0
  %v1169 = vadd.f32 %v1091, %v1165
  %v1170 = vadd.f32 %v1092, %v1167
  %v1171 = vtanh.pop %v1169
  %v1172 = vtanh.pop %v1170
  %v1173 = vmul.f32 %v1171, %v270
  %v1174 = vmul.f32 %v1172, %v274
  %v1175 = vadd.f32 %v1173, %v283
  %v1176 = vadd.f32 %v1174, %v287
  %v1177 = vmul.f32 %v1175, %v1085
  %v1178 = vmul.f32 %v1175, %v1176
  %1180 = vrot.lane.b32.xlu0 %v1178, 64
  %v1181 = vpop.permute.xlu0 %1180
  %v1183 = vadd.f32 %v1177, %v1181
  %v1184 = vtanh.pop %v1183
  %v1185 = vmul.f32 %v1176, %v1184
  %s1186 = smul.u32 10, 2
  %s1187 = smul.addr %s1186, 8
  %s1188 = scalar_lea.vmem [#allocation2], %s1187
  %v1189 = vld [vmem:[%s1188] sm:$0xff]
  %v1190 = vld [vmem:[%s1188 + $0x8] sm:$0xff]
  %1192 = vrot.lane.b32.xlu0 %v1185, 64
  %v1193 = vpop.permute.xlu0 %1192
  %v1194 = vsel %vm307, %v1193, 0
  %1196 = vmatprep.subr.mxu0 %v244
  %1197 = vmatpush1.msra.mxu0 %v243
  %1198 = vmatprep.subr.mxu0 %v246
  %1199 = vmatpush1.msra.mxu0 %v245
  %1200 = vmatprep.subr.mxu0 %v248
  %1201 = vmatpush1.msra.mxu0 %v247
  %1202 = vmatprep.subr.mxu0 %v250
  %1203 = vmatpush1.msra.mxu0 %v249
  %1204 = vmatprep.subr.mxu0 %v252
  %1205 = vmatpush1.msra.mxu0 %v251
  %1206 = vmatprep.subr.mxu0 %v254
  %1207 = vmatpush1.msra.mxu0 %v253
  %1208 = vmatprep.subr.mxu0 %v256
  %1209 = vmatpush1.msra.mxu0 %v255
  %1210 = vmatprep.subr.mxu0 %v258
  %1211 = vmatpush1.msra.mxu0 %v257
  %1212 = vmatprep.subr.mxu0 0.0
  %1213 = vmatpush1.msra.mxu0 0.0
  %1214 = vmatprep.subr.mxu0 0.0
  %1215 = vmatpush1.msra.mxu0 0.0
  %1216 = vmatprep.subr.mxu0 0.0
  %1217 = vmatpush1.msra.mxu0 0.0
  %1218 = vmatprep.subr.mxu0 0.0
  %1219 = vmatpush1.msra.mxu0 0.0
  %1220 = vmatprep.subr.mxu0 0.0
  %1221 = vmatpush1.msra.mxu0 0.0
  %1222 = vmatprep.subr.mxu0 0.0
  %1223 = vmatpush1.msra.mxu0 0.0
  %1224 = vmatprep.subr.mxu0 0.0
  %1225 = vmatpush1.msra.mxu0 0.0
  %1226 = vmatprep.subr.mxu0 0.0
  %1227 = vmatpush1.msra.mxu0 0.0
  %1228 = vmatprep.subr.mxu0 0.0
  %1229 = vmatpush1.msra.mxu0 0.0
  %1230 = vmatprep.subr.mxu0 0.0
  %1231 = vmatpush1.msra.mxu0 0.0
  %1232 = vmatprep.subr.mxu0 0.0
  %1233 = vmatpush1.msra.mxu0 0.0
  %1234 = vmatprep.subr.mxu0 0.0
  %1235 = vmatpush1.msra.mxu0 0.0
  %1236 = vmatprep.subr.mxu0 0.0
  %1237 = vmatpush1.msra.mxu0 0.0
  %1238 = vmatprep.subr.mxu0 0.0
  %1239 = vmatpush1.msra.mxu0 0.0
  %1240 = vmatprep.subr.mxu0 0.0
  %1241 = vmatpush1.msra.mxu0 0.0
  %1242 = vmatprep.subr.mxu0 0.0
  %1243 = vmatpush1.msra.mxu0 0.0
  %1244 = vmatprep.subr.mxu0 0.0
  %1245 = vmatpush1.msra.mxu0 0.0
  %1246 = vmatprep.subr.mxu0 0.0
  %1247 = vmatpush1.msra.mxu0 0.0
  %1248 = vmatprep.subr.mxu0 0.0
  %1249 = vmatpush1.msra.mxu0 0.0
  %1250 = vmatprep.subr.mxu0 0.0
  %1251 = vmatpush1.msra.mxu0 0.0
  %1252 = vmatprep.subr.mxu0 0.0
  %1253 = vmatpush1.msra.mxu0 0.0
  %1254 = vmatprep.subr.mxu0 0.0
  %1255 = vmatpush1.msra.mxu0 0.0
  %1256 = vmatprep.subr.mxu0 0.0
  %1257 = vmatpush1.msra.mxu0 0.0
  %1258 = vmatprep.subr.mxu0 0.0
  %1259 = vmatpush1.msra.mxu0 0.0
  %1260 = vmatprep.mubr.f32.mxu0 0.0
  %1261 = vmatmul.mubr.f32.gmra.mrb[0].mxu0 %v1194
  %v1262 = vpop.f32.mrb[0].mxu0
  %v1263 = vadd.f32 0.0, %v1262
  %v1264 = vpop.f32.mrb[0].mxu0
  %v1265 = vadd.f32 0.0, %v1264
  %1266 = vdwg.mxu0
  %v1267 = vadd.f32 %v1189, %v1263
  %v1268 = vadd.f32 %v1190, %v1265
  %v1269 = vtanh.pop %v1267
  %v1270 = vtanh.pop %v1268
  %v1271 = vmul.f32 %v1269, %v270
  %v1272 = vmul.f32 %v1270, %v274
  %v1273 = vadd.f32 %v1271, %v283
  %v1274 = vadd.f32 %v1272, %v287
  %v1275 = vmul.f32 %v1273, %v1183
  %v1276 = vmul.f32 %v1273, %v1274
  %1278 = vrot.lane.b32.xlu0 %v1276, 64
  %v1279 = vpop.permute.xlu0 %1278
  %v1281 = vadd.f32 %v1275, %v1279
  %v1282 = vtanh.pop %v1281
  %v1283 = vmul.f32 %v1274, %v1282
  %s1284 = smul.u32 11, 2
  %s1285 = smul.addr %s1284, 8
  %s1286 = scalar_lea.vmem [#allocation2], %s1285
  %v1287 = vld [vmem:[%s1286] sm:$0xff]
  %v1288 = vld [vmem:[%s1286 + $0x8] sm:$0xff]
  %1290 = vrot.lane.b32.xlu0 %v1283, 64
  %v1291 = vpop.permute.xlu0 %1290
  %v1292 = vsel %vm307, %v1291, 0
  %1294 = vmatprep.subr.mxu0 %v244
  %1295 = vmatpush1.msra.mxu0 %v243
  %1296 = vmatprep.subr.mxu0 %v246
  %1297 = vmatpush1.msra.mxu0 %v245
  %1298 = vmatprep.subr.mxu0 %v248
  %1299 = vmatpush1.msra.mxu0 %v247
  %1300 = vmatprep.subr.mxu0 %v250
  %1301 = vmatpush1.msra.mxu0 %v249
  %1302 = vmatprep.subr.mxu0 %v252
  %1303 = vmatpush1.msra.mxu0 %v251
  %1304 = vmatprep.subr.mxu0 %v254
  %1305 = vmatpush1.msra.mxu0 %v253
  %1306 = vmatprep.subr.mxu0 %v256
  %1307 = vmatpush1.msra.mxu0 %v255
  %1308 = vmatprep.subr.mxu0 %v258
  %1309 = vmatpush1.msra.mxu0 %v257
  %1310 = vmatprep.subr.mxu0 0.0
  %1311 = vmatpush1.msra.mxu0 0.0
  %1312 = vmatprep.subr.mxu0 0.0
  %1313 = vmatpush1.msra.mxu0 0.0
  %1314 = vmatprep.subr.mxu0 0.0
  %1315 = vmatpush1.msra.mxu0 0.0
  %1316 = vmatprep.subr.mxu0 0.0
  %1317 = vmatpush1.msra.mxu0 0.0
  %1318 = vmatprep.subr.mxu0 0.0
  %1319 = vmatpush1.msra.mxu0 0.0
  %1320 = vmatprep.subr.mxu0 0.0
  %1321 = vmatpush1.msra.mxu0 0.0
  %1322 = vmatprep.subr.mxu0 0.0
  %1323 = vmatpush1.msra.mxu0 0.0
  %1324 = vmatprep.subr.mxu0 0.0
  %1325 = vmatpush1.msra.mxu0 0.0
  %1326 = vmatprep.subr.mxu0 0.0
  %1327 = vmatpush1.msra.mxu0 0.0
  %1328 = vmatprep.subr.mxu0 0.0
  %1329 = vmatpush1.msra.mxu0 0.0
  %1330 = vmatprep.subr.mxu0 0.0
  %1331 = vmatpush1.msra.mxu0 0.0
  %1332 = vmatprep.subr.mxu0 0.0
  %1333 = vmatpush1.msra.mxu0 0.0
  %1334 = vmatprep.subr.mxu0 0.0
  %1335 = vmatpush1.msra.mxu0 0.0
  %1336 = vmatprep.subr.mxu0 0.0
  %1337 = vmatpush1.msra.mxu0 0.0
  %1338 = vmatprep.subr.mxu0 0.0
  %1339 = vmatpush1.msra.mxu0 0.0
  %1340 = vmatprep.subr.mxu0 0.0
  %1341 = vmatpush1.msra.mxu0 0.0
  %1342 = vmatprep.subr.mxu0 0.0
  %1343 = vmatpush1.msra.mxu0 0.0
  %1344 = vmatprep.subr.mxu0 0.0
  %1345 = vmatpush1.msra.mxu0 0.0
  %1346 = vmatprep.subr.mxu0 0.0
  %1347 = vmatpush1.msra.mxu0 0.0
  %1348 = vmatprep.subr.mxu0 0.0
  %1349 = vmatpush1.msra.mxu0 0.0
  %1350 = vmatprep.subr.mxu0 0.0
  %1351 = vmatpush1.msra.mxu0 0.0
  %1352 = vmatprep.subr.mxu0 0.0
  %1353 = vmatpush1.msra.mxu0 0.0
  %1354 = vmatprep.subr.mxu0 0.0
  %1355 = vmatpush1.msra.mxu0 0.0
  %1356 = vmatprep.subr.mxu0 0.0
  %1357 = vmatpush1.msra.mxu0 0.0
  %1358 = vmatprep.mubr.f32.mxu0 0.0
  %1359 = vmatmul.mubr.f32.gmra.mrb[0].mxu0 %v1292
  %v1360 = vpop.f32.mrb[0].mxu0
  %v1361 = vadd.f32 0.0, %v1360
  %v1362 = vpop.f32.mrb[0].mxu0
  %v1363 = vadd.f32 0.0, %v1362
  %1364 = vdwg.mxu0
  %v1365 = vadd.f32 %v1287, %v1361
  %v1366 = vadd.f32 %v1288, %v1363
  %v1367 = vtanh.pop %v1365
  %v1368 = vtanh.pop %v1366
  %v1369 = vmul.f32 %v1367, %v270
  %v1370 = vmul.f32 %v1368, %v274
  %v1371 = vadd.f32 %v1369, %v283
  %v1372 = vadd.f32 %v1370, %v287
  %v1373 = vmul.f32 %v1371, %v1281
  %v1374 = vmul.f32 %v1371, %v1372
  %1376 = vrot.lane.b32.xlu0 %v1374, 64
  %v1377 = vpop.permute.xlu0 %1376
  %v1379 = vadd.f32 %v1373, %v1377
  %v1380 = vtanh.pop %v1379
  %v1381 = vmul.f32 %v1372, %v1380
  %s1382 = smul.u32 12, 2
  %s1383 = smul.addr %s1382, 8
  %s1384 = scalar_lea.vmem [#allocation2], %s1383
  %v1385 = vld [vmem:[%s1384] sm:$0xff]
  %v1386 = vld [vmem:[%s1384 + $0x8] sm:$0xff]
  %1388 = vrot.lane.b32.xlu0 %v1381, 64
  %v1389 = vpop.permute.xlu0 %1388
  %v1390 = vsel %vm307, %v1389, 0
  %1392 = vmatprep.subr.mxu0 %v244
  %1393 = vmatpush1.msra.mxu0 %v243
  %1394 = vmatprep.subr.mxu0 %v246
  %1395 = vmatpush1.msra.mxu0 %v245
  %1396 = vmatprep.subr.mxu0 %v248
  %1397 = vmatpush1.msra.mxu0 %v247
  %1398 = vmatprep.subr.mxu0 %v250
  %1399 = vmatpush1.msra.mxu0 %v249
  %1400 = vmatprep.subr.mxu0 %v252
  %1401 = vmatpush1.msra.mxu0 %v251
  %1402 = vmatprep.subr.mxu0 %v254
  %1403 = vmatpush1.msra.mxu0 %v253
  %1404 = vmatprep.subr.mxu0 %v256
  %1405 = vmatpush1.msra.mxu0 %v255
  %1406 = vmatprep.subr.mxu0 %v258
  %1407 = vmatpush1.msra.mxu0 %v257
  %1408 = vmatprep.subr.mxu0 0.0
  %1409 = vmatpush1.msra.mxu0 0.0
  %1410 = vmatprep.subr.mxu0 0.0
  %1411 = vmatpush1.msra.mxu0 0.0
  %1412 = vmatprep.subr.mxu0 0.0
  %1413 = vmatpush1.msra.mxu0 0.0
  %1414 = vmatprep.subr.mxu0 0.0
  %1415 = vmatpush1.msra.mxu0 0.0
  %1416 = vmatprep.subr.mxu0 0.0
  %1417 = vmatpush1.msra.mxu0 0.0
  %1418 = vmatprep.subr.mxu0 0.0
  %1419 = vmatpush1.msra.mxu0 0.0
  %1420 = vmatprep.subr.mxu0 0.0
  %1421 = vmatpush1.msra.mxu0 0.0
  %1422 = vmatprep.subr.mxu0 0.0
  %1423 = vmatpush1.msra.mxu0 0.0
  %1424 = vmatprep.subr.mxu0 0.0
  %1425 = vmatpush1.msra.mxu0 0.0
  %1426 = vmatprep.subr.mxu0 0.0
  %1427 = vmatpush1.msra.mxu0 0.0
  %1428 = vmatprep.subr.mxu0 0.0
  %1429 = vmatpush1.msra.mxu0 0.0
  %1430 = vmatprep.subr.mxu0 0.0
  %1431 = vmatpush1.msra.mxu0 0.0
  %1432 = vmatprep.subr.mxu0 0.0
  %1433 = vmatpush1.msra.mxu0 0.0
  %1434 = vmatprep.subr.mxu0 0.0
  %1435 = vmatpush1.msra.mxu0 0.0
  %1436 = vmatprep.subr.mxu0 0.0
  %1437 = vmatpush1.msra.mxu0 0.0
  %1438 = vmatprep.subr.mxu0 0.0
  %1439 = vmatpush1.msra.mxu0 0.0
  %1440 = vmatprep.subr.mxu0 0.0
  %1441 = vmatpush1.msra.mxu0 0.0
  %1442 = vmatprep.subr.mxu0 0.0
  %1443 = vmatpush1.msra.mxu0 0.0
  %1444 = vmatprep.subr.mxu0 0.0
  %1445 = vmatpush1.msra.mxu0 0.0
  %1446 = vmatprep.subr.mxu0 0.0
  %1447 = vmatpush1.msra.mxu0 0.0
  %1448 = vmatprep.subr.mxu0 0.0
  %1449 = vmatpush1.msra.mxu0 0.0
  %1450 = vmatprep.subr.mxu0 0.0
  %1451 = vmatpush1.msra.mxu0 0.0
  %1452 = vmatprep.subr.mxu0 0.0
  %1453 = vmatpush1.msra.mxu0 0.0
  %1454 = vmatprep.subr.mxu0 0.0
  %1455 = vmatpush1.msra.mxu0 0.0
  %1456 = vmatprep.mubr.f32.mxu0 0.0
  %1457 = vmatmul.mubr.f32.gmra.mrb[0].mxu0 %v1390
  %v1458 = vpop.f32.mrb[0].mxu0
  %v1459 = vadd.f32 0.0, %v1458
  %v1460 = vpop.f32.mrb[0].mxu0
  %v1461 = vadd.f32 0.0, %v1460
  %1462 = vdwg.mxu0
  %v1463 = vadd.f32 %v1385, %v1459
  %v1464 = vadd.f32 %v1386, %v1461
  %v1465 = vtanh.pop %v1463
  %v1466 = vtanh.pop %v1464
  %v1467 = vmul.f32 %v1465, %v270
  %v1468 = vmul.f32 %v1466, %v274
  %v1469 = vadd.f32 %v1467, %v283
  %v1470 = vadd.f32 %v1468, %v287
  %v1471 = vmul.f32 %v1469, %v1379
  %v1472 = vmul.f32 %v1469, %v1470
  %1474 = vrot.lane.b32.xlu0 %v1472, 64
  %v1475 = vpop.permute.xlu0 %1474
  %v1477 = vadd.f32 %v1471, %v1475
  %v1478 = vtanh.pop %v1477
  %v1479 = vmul.f32 %v1470, %v1478
  %s1480 = smul.u32 13, 2
  %s1481 = smul.addr %s1480, 8
  %s1482 = scalar_lea.vmem [#allocation2], %s1481
  %v1483 = vld [vmem:[%s1482] sm:$0xff]
  %v1484 = vld [vmem:[%s1482 + $0x8] sm:$0xff]
  %1486 = vrot.lane.b32.xlu0 %v1479, 64
  %v1487 = vpop.permute.xlu0 %1486
  %v1488 = vsel %vm307, %v1487, 0
  %1490 = vmatprep.subr.mxu0 %v244
  %1491 = vmatpush1.msra.mxu0 %v243
  %1492 = vmatprep.subr.mxu0 %v246
  %1493 = vmatpush1.msra.mxu0 %v245
  %1494 = vmatprep.subr.mxu0 %v248
  %1495 = vmatpush1.msra.mxu0 %v247
  %1496 = vmatprep.subr.mxu0 %v250
  %1497 = vmatpush1.msra.mxu0 %v249
  %1498 = vmatprep.subr.mxu0 %v252
  %1499 = vmatpush1.msra.mxu0 %v251
  %1500 = vmatprep.subr.mxu0 %v254
  %1501 = vmatpush1.msra.mxu0 %v253
  %1502 = vmatprep.subr.mxu0 %v256
  %1503 = vmatpush1.msra.mxu0 %v255
  %1504 = vmatprep.subr.mxu0 %v258
  %1505 = vmatpush1.msra.mxu0 %v257
  %1506 = vmatprep.subr.mxu0 0.0
  %1507 = vmatpush1.msra.mxu0 0.0
  %1508 = vmatprep.subr.mxu0 0.0
  %1509 = vmatpush1.msra.mxu0 0.0
  %1510 = vmatprep.subr.mxu0 0.0
  %1511 = vmatpush1.msra.mxu0 0.0
  %1512 = vmatprep.subr.mxu0 0.0
  %1513 = vmatpush1.msra.mxu0 0.0
  %1514 = vmatprep.subr.mxu0 0.0
  %1515 = vmatpush1.msra.mxu0 0.0
  %1516 = vmatprep.subr.mxu0 0.0
  %1517 = vmatpush1.msra.mxu0 0.0
  %1518 = vmatprep.subr.mxu0 0.0
  %1519 = vmatpush1.msra.mxu0 0.0
  %1520 = vmatprep.subr.mxu0 0.0
  %1521 = vmatpush1.msra.mxu0 0.0
  %1522 = vmatprep.subr.mxu0 0.0
  %1523 = vmatpush1.msra.mxu0 0.0
  %1524 = vmatprep.subr.mxu0 0.0
  %1525 = vmatpush1.msra.mxu0 0.0
  %1526 = vmatprep.subr.mxu0 0.0
  %1527 = vmatpush1.msra.mxu0 0.0
  %1528 = vmatprep.subr.mxu0 0.0
  %1529 = vmatpush1.msra.mxu0 0.0
  %1530 = vmatprep.subr.mxu0 0.0
  %1531 = vmatpush1.msra.mxu0 0.0
  %1532 = vmatprep.subr.mxu0 0.0
  %1533 = vmatpush1.msra.mxu0 0.0
  %1534 = vmatprep.subr.mxu0 0.0
  %1535 = vmatpush1.msra.mxu0 0.0
  %1536 = vmatprep.subr.mxu0 0.0
  %1537 = vmatpush1.msra.mxu0 0.0
  %1538 = vmatprep.subr.mxu0 0.0
  %1539 = vmatpush1.msra.mxu0 0.0
  %1540 = vmatprep.subr.mxu0 0.0
  %1541 = vmatpush1.msra.mxu0 0.0
  %1542 = vmatprep.subr.mxu0 0.0
  %1543 = vmatpush1.msra.mxu0 0.0
  %1544 = vmatprep.subr.mxu0 0.0
  %1545 = vmatpush1.msra.mxu0 0.0
  %1546 = vmatprep.subr.mxu0 0.0
  %1547 = vmatpush1.msra.mxu0 0.0
  %1548 = vmatprep.subr.mxu0 0.0
  %1549 = vmatpush1.msra.mxu0 0.0
  %1550 = vmatprep.subr.mxu0 0.0
  %1551 = vmatpush1.msra.mxu0 0.0
  %1552 = vmatprep.subr.mxu0 0.0
  %1553 = vmatpush1.msra.mxu0 0.0
  %1554 = vmatprep.mubr.f32.mxu0 0.0
  %1555 = vmatmul.mubr.f32.gmra.mrb[0].mxu0 %v1488
  %v1556 = vpop.f32.mrb[0].mxu0
  %v1557 = vadd.f32 0.0, %v1556
  %v1558 = vpop.f32.mrb[0].mxu0
  %v1559 = vadd.f32 0.0, %v1558
  %1560 = vdwg.mxu0
  %v1561 = vadd.f32 %v1483, %v1557
  %v1562 = vadd.f32 %v1484, %v1559
  %v1563 = vtanh.pop %v1561
  %v1564 = vtanh.pop %v1562
  %v1565 = vmul.f32 %v1563, %v270
  %v1566 = vmul.f32 %v1564, %v274
  %v1567 = vadd.f32 %v1565, %v283
  %v1568 = vadd.f32 %v1566, %v287
  %v1569 = vmul.f32 %v1567, %v1477
  %v1570 = vmul.f32 %v1567, %v1568
  %1572 = vrot.lane.b32.xlu0 %v1570, 64
  %v1573 = vpop.permute.xlu0 %1572
  %v1575 = vadd.f32 %v1569, %v1573
  %v1576 = vtanh.pop %v1575
  %v1577 = vmul.f32 %v1568, %v1576
  %s1578 = smul.u32 14, 2
  %s1579 = smul.addr %s1578, 8
  %s1580 = scalar_lea.vmem [#allocation2], %s1579
  %v1581 = vld [vmem:[%s1580] sm:$0xff]
  %v1582 = vld [vmem:[%s1580 + $0x8] sm:$0xff]
  %1584 = vrot.lane.b32.xlu0 %v1577, 64
  %v1585 = vpop.permute.xlu0 %1584
  %v1586 = vsel %vm307, %v1585, 0
  %1588 = vmatprep.subr.mxu0 %v244
  %1589 = vmatpush1.msra.mxu0 %v243
  %1590 = vmatprep.subr.mxu0 %v246
  %1591 = vmatpush1.msra.mxu0 %v245
  %1592 = vmatprep.subr.mxu0 %v248
  %1593 = vmatpush1.msra.mxu0 %v247
  %1594 = vmatprep.subr.mxu0 %v250
  %1595 = vmatpush1.msra.mxu0 %v249
  %1596 = vmatprep.subr.mxu0 %v252
  %1597 = vmatpush1.msra.mxu0 %v251
  %1598 = vmatprep.subr.mxu0 %v254
  %1599 = vmatpush1.msra.mxu0 %v253
  %1600 = vmatprep.subr.mxu0 %v256
  %1601 = vmatpush1.msra.mxu0 %v255
  %1602 = vmatprep.subr.mxu0 %v258
  %1603 = vmatpush1.msra.mxu0 %v257
  %1604 = vmatprep.subr.mxu0 0.0
  %1605 = vmatpush1.msra.mxu0 0.0
  %1606 = vmatprep.subr.mxu0 0.0
  %1607 = vmatpush1.msra.mxu0 0.0
  %1608 = vmatprep.subr.mxu0 0.0
  %1609 = vmatpush1.msra.mxu0 0.0
  %1610 = vmatprep.subr.mxu0 0.0
  %1611 = vmatpush1.msra.mxu0 0.0
  %1612 = vmatprep.subr.mxu0 0.0
  %1613 = vmatpush1.msra.mxu0 0.0
  %1614 = vmatprep.subr.mxu0 0.0
  %1615 = vmatpush1.msra.mxu0 0.0
  %1616 = vmatprep.subr.mxu0 0.0
  %1617 = vmatpush1.msra.mxu0 0.0
  %1618 = vmatprep.subr.mxu0 0.0
  %1619 = vmatpush1.msra.mxu0 0.0
  %1620 = vmatprep.subr.mxu0 0.0
  %1621 = vmatpush1.msra.mxu0 0.0
  %1622 = vmatprep.subr.mxu0 0.0
  %1623 = vmatpush1.msra.mxu0 0.0
  %1624 = vmatprep.subr.mxu0 0.0
  %1625 = vmatpush1.msra.mxu0 0.0
  %1626 = vmatprep.subr.mxu0 0.0
  %1627 = vmatpush1.msra.mxu0 0.0
  %1628 = vmatprep.subr.mxu0 0.0
  %1629 = vmatpush1.msra.mxu0 0.0
  %1630 = vmatprep.subr.mxu0 0.0
  %1631 = vmatpush1.msra.mxu0 0.0
  %1632 = vmatprep.subr.mxu0 0.0
  %1633 = vmatpush1.msra.mxu0 0.0
  %1634 = vmatprep.subr.mxu0 0.0
  %1635 = vmatpush1.msra.mxu0 0.0
  %1636 = vmatprep.subr.mxu0 0.0
  %1637 = vmatpush1.msra.mxu0 0.0
  %1638 = vmatprep.subr.mxu0 0.0
  %1639 = vmatpush1.msra.mxu0 0.0
  %1640 = vmatprep.subr.mxu0 0.0
  %1641 = vmatpush1.msra.mxu0 0.0
  %1642 = vmatprep.subr.mxu0 0.0
  %1643 = vmatpush1.msra.mxu0 0.0
  %1644 = vmatprep.subr.mxu0 0.0
  %1645 = vmatpush1.msra.mxu0 0.0
  %1646 = vmatprep.subr.mxu0 0.0
  %1647 = vmatpush1.msra.mxu0 0.0
  %1648 = vmatprep.subr.mxu0 0.0
  %1649 = vmatpush1.msra.mxu0 0.0
  %1650 = vmatprep.subr.mxu0 0.0
  %1651 = vmatpush1.msra.mxu0 0.0
  %1652 = vmatprep.mubr.f32.mxu0 0.0
  %1653 = vmatmul.mubr.f32.gmra.mrb[0].mxu0 %v1586
  %v1654 = vpop.f32.mrb[0].mxu0
  %v1655 = vadd.f32 0.0, %v1654
  %v1656 = vpop.f32.mrb[0].mxu0
  %v1657 = vadd.f32 0.0, %v1656
  %1658 = vdwg.mxu0
  %v1659 = vadd.f32 %v1581, %v1655
  %v1660 = vadd.f32 %v1582, %v1657
  %v1661 = vtanh.pop %v1659
  %v1662 = vtanh.pop %v1660
  %v1663 = vmul.f32 %v1661, %v270
  %v1664 = vmul.f32 %v1662, %v274
  %v1665 = vadd.f32 %v1663, %v283
  %v1666 = vadd.f32 %v1664, %v287
  %v1667 = vmul.f32 %v1665, %v1575
  %v1668 = vmul.f32 %v1665, %v1666
  %1670 = vrot.lane.b32.xlu0 %v1668, 64
  %v1671 = vpop.permute.xlu0 %1670
  %v1673 = vadd.f32 %v1667, %v1671
  %v1674 = vtanh.pop %v1673
  %v1675 = vmul.f32 %v1666, %v1674
  %s1676 = smul.u32 15, 2
  %s1677 = smul.addr %s1676, 8
  %s1678 = scalar_lea.vmem [#allocation2], %s1677
  %v1679 = vld [vmem:[%s1678] sm:$0xff]
  %v1680 = vld [vmem:[%s1678 + $0x8] sm:$0xff]
  %1682 = vrot.lane.b32.xlu0 %v1675, 64
  %v1683 = vpop.permute.xlu0 %1682
  %v1684 = vsel %vm307, %v1683, 0
  %1686 = vmatprep.subr.mxu0 %v244
  %1687 = vmatpush1.msra.mxu0 %v243
  %1688 = vmatprep.subr.mxu0 %v246
  %1689 = vmatpush1.msra.mxu0 %v245
  %1690 = vmatprep.subr.mxu0 %v248
  %1691 = vmatpush1.msra.mxu0 %v247
  %1692 = vmatprep.subr.mxu0 %v250
  %1693 = vmatpush1.msra.mxu0 %v249
  %1694 = vmatprep.subr.mxu0 %v252
  %1695 = vmatpush1.msra.mxu0 %v251
  %1696 = vmatprep.subr.mxu0 %v254
  %1697 = vmatpush1.msra.mxu0 %v253
  %1698 = vmatprep.subr.mxu0 %v256
  %1699 = vmatpush1.msra.mxu0 %v255
  %1700 = vmatprep.subr.mxu0 %v258
  %1701 = vmatpush1.msra.mxu0 %v257
  %1702 = vmatprep.subr.mxu0 0.0
  %1703 = vmatpush1.msra.mxu0 0.0
  %1704 = vmatprep.subr.mxu0 0.0
  %1705 = vmatpush1.msra.mxu0 0.0
  %1706 = vmatprep.subr.mxu0 0.0
  %1707 = vmatpush1.msra.mxu0 0.0
  %1708 = vmatprep.subr.mxu0 0.0
  %1709 = vmatpush1.msra.mxu0 0.0
  %1710 = vmatprep.subr.mxu0 0.0
  %1711 = vmatpush1.msra.mxu0 0.0
  %1712 = vmatprep.subr.mxu0 0.0
  %1713 = vmatpush1.msra.mxu0 0.0
  %1714 = vmatprep.subr.mxu0 0.0
  %1715 = vmatpush1.msra.mxu0 0.0
  %1716 = vmatprep.subr.mxu0 0.0
  %1717 = vmatpush1.msra.mxu0 0.0
  %1718 = vmatprep.subr.mxu0 0.0
  %1719 = vmatpush1.msra.mxu0 0.0
  %1720 = vmatprep.subr.mxu0 0.0
  %1721 = vmatpush1.msra.mxu0 0.0
  %1722 = vmatprep.subr.mxu0 0.0
  %1723 = vmatpush1.msra.mxu0 0.0
  %1724 = vmatprep.subr.mxu0 0.0
  %1725 = vmatpush1.msra.mxu0 0.0
  %1726 = vmatprep.subr.mxu0 0.0
  %1727 = vmatpush1.msra.mxu0 0.0
  %1728 = vmatprep.subr.mxu0 0.0
  %1729 = vmatpush1.msra.mxu0 0.0
  %1730 = vmatprep.subr.mxu0 0.0
  %1731 = vmatpush1.msra.mxu0 0.0
  %1732 = vmatprep.subr.mxu0 0.0
  %1733 = vmatpush1.msra.mxu0 0.0
  %1734 = vmatprep.subr.mxu0 0.0
  %1735 = vmatpush1.msra.mxu0 0.0
  %1736 = vmatprep.subr.mxu0 0.0
  %1737 = vmatpush1.msra.mxu0 0.0
  %1738 = vmatprep.subr.mxu0 0.0
  %1739 = vmatpush1.msra.mxu0 0.0
  %1740 = vmatprep.subr.mxu0 0.0
  %1741 = vmatpush1.msra.mxu0 0.0
  %1742 = vmatprep.subr.mxu0 0.0
  %1743 = vmatpush1.msra.mxu0 0.0
  %1744 = vmatprep.subr.mxu0 0.0
  %1745 = vmatpush1.msra.mxu0 0.0
  %1746 = vmatprep.subr.mxu0 0.0
  %1747 = vmatpush1.msra.mxu0 0.0
  %1748 = vmatprep.subr.mxu0 0.0
  %1749 = vmatpush1.msra.mxu0 0.0
  %1750 = vmatprep.mubr.f32.mxu0 0.0
  %1751 = vmatmul.mubr.f32.gmra.mrb[0].mxu0 %v1684
  %v1752 = vpop.f32.mrb[0].mxu0
  %v1753 = vadd.f32 0.0, %v1752
  %v1754 = vpop.f32.mrb[0].mxu0
  %v1755 = vadd.f32 0.0, %v1754
  %1756 = vdwg.mxu0
  %v1757 = vadd.f32 %v1679, %v1753
  %v1758 = vadd.f32 %v1680, %v1755
  %v1759 = vtanh.pop %v1757
  %v1760 = vtanh.pop %v1758
  %v1761 = vmul.f32 %v1759, %v270
  %v1762 = vmul.f32 %v1760, %v274
  %v1763 = vadd.f32 %v1761, %v283
  %v1764 = vadd.f32 %v1762, %v287
  %v1765 = vmul.f32 %v1763, %v1673
  %v1766 = vmul.f32 %v1763, %v1764
  %1768 = vrot.lane.b32.xlu0 %v1766, 64
  %v1769 = vpop.permute.xlu0 %1768
  %v1771 = vadd.f32 %v1765, %v1769
  %v1772 = vtanh.pop %v1771
  %v1773 = vmul.f32 %v1764, %v1772
  %v1774 = vld [vmem:[%s5] sm:$0x1]
  %v1776 = vlaneseq
  %v1777 = vshrl.u32 %v1776, 7
  %v1778 = vsub.s32 0, %v1777
  %v1779 = vrot.slane %v1774, %v1778
  %1780 = vrot.lane.b32.xlu0 %v1779, 64
  %v1781 = vpop.permute.xlu0 %1780
  %v1783 = vmul.f32 %v1773, %v1781
  %1785 = vrot.lane.b32.xlu0 %v1783, 64
  %v1786 = vpop.permute.xlu0 %1785
  %v1788 = vsel %vm307, %v1786, 0.0
  %1789 = vadd.xlane.f32.xlu0 %v1788
  %v1790 = vpop.xlane.xlu0 %1789
  %s1791 = sld [smem:[#allocation3]]
  %v1792 = vstv %s1791
  %v1793 = vadd.f32 %v1790, %v1792
  %vm1794 = vcmask 7168
  %1795 = vst.msk [vmem:[%s7] sm:$0xff] %vm1794, %v1793
  // Predicated region
  $region30: #{tpu_custom_call.1} parent=0 // pred_check
    _
  $region31: #{tpu_custom_call.1} parent=0 // pred_check_branch
    %1797 = sbr.rel (0) target = $region33
  $region32: #{tpu_custom_call.1} parent=0 // pred_region
    _
  $region33: #{tpu_custom_call.1} parent=0 // pred_fallthru
    _
  // Predicated region
  $region34: #{tpu_custom_call.1} parent=0 // pred_check
    _
  $region35: #{tpu_custom_call.1} parent=0 // pred_check_branch
    %1799 = sbr.rel (0) target = $region37
  $region36: #{tpu_custom_call.1} parent=0 // pred_region
    _
  $region37: #{tpu_custom_call.1} parent=0 // pred_fallthru
    _

</llo_original>
